<compile_context>
chip_gen: v7x
topology: tpu7x:2x2x1
jax: 0.10.0
libtpu: 0.0.40
codegen_flags: <defaults>
</compile_context>

<pallas_src>
import functools
import math

import jax
import jax.numpy as jnp
from jax.experimental import pallas as pl
from jax.experimental.pallas import tpu as pltpu


# -------------------------- in-kernel math helpers --------------------------

def _gelu_exact(x):
    # PyTorch nn.GELU() default = exact erf formulation.
    return 0.5 * x * (1.0 + jax.lax.erf(x * (1.0 / math.sqrt(2.0))))


# ------------------------------ fused kernel --------------------------------

def fused_combined_kernel(
        s1_ref, s2_ref,            # (L1*B, E), (L2*B, E)  position-major rows (l*B + b)
        wp_ref,                    # (2, E, (2+H)*E)  packed [q*scale | k | v@Wo per head]
        bias_ref,                  # (7, BW) packed biases (see pack_params)
        w1_ref,                    # ((L1+L2)*E, 4H)  = W1^T
        w2_ref,                    # (4H, H)          = W2^T
        w3_ref,                    # (H, OUT_PAD)     = W3^T padded to lane-dense
        out_ref, sig_ref,          # (B, OUT_PAD) x2
        *, batch, len1, len2, emb, heads):
    hd = emb // heads
    pw = wp_ref.shape[2]

    s1 = s1_ref[...]
    s2 = s2_ref[...]
    bias = bias_ref[...]

    # Packed input projections (scale and Wo already folded in at pack time):
    #   seq1 -> [ q (attn1, pre-scaled) | k (attn2) | per-head v@Wo (attn2) ]
    #   seq2 -> [ q (attn2, pre-scaled) | k (attn1) | per-head v@Wo (attn1) ]
    p1 = jnp.dot(s1, wp_ref[0], preferred_element_type=jnp.float32) + bias[0:1, :pw]
    p2 = jnp.dot(s2, wp_ref[1], preferred_element_type=jnp.float32) + bias[1:2, :pw]

    q1, k_from_s1, vfold_from_s1 = p1[:, :emb], p1[:, emb:2 * emb], p1[:, 2 * emb:]
    q2, k_from_s2, vfold_from_s2 = p2[:, :emb], p2[:, emb:2 * emb], p2[:, 2 * emb:]

    def batch_mask(n_q, n_k):
        # Additive mask: 0 where query/key rows belong to the same batch, else -1e30.
        r = jax.lax.broadcasted_iota(jnp.int32, (n_q, n_k), 0) % batch
        c = jax.lax.broadcasted_iota(jnp.int32, (n_q, n_k), 1) % batch
        return jnp.where(r == c, 0.0, -1e30).astype(jnp.float32)

    def mha(q, k, v_fold, mask):
        """Multi-head cross attention on position-major 2-D operands.

        Batch isolation via the additive mask; scale already folded into q;
        Wo already folded into v_fold (each head's block is E lanes wide), so
        every head folds straight into the accumulator: acc += P_h @ v_fold_h.
        """
        acc = None
        for h in range(heads):
            sl = slice(h * hd, (h + 1) * hd)
            s = jax.lax.dot_general(q[:, sl], k[:, sl], (((1,), (1,)), ((), ())),
                                    preferred_element_type=jnp.float32)
            s = s + mask
            s = s - jnp.max(s, axis=-1, keepdims=True)
            e = jnp.exp(s)
            p = e / jnp.sum(e, axis=-1, keepdims=True)   # exact divide (keeps 1e-4 tol)
            ctx = jnp.dot(p, v_fold[:, h * emb:(h + 1) * emb],
                          preferred_element_type=jnp.float32)
            acc = ctx if acc is None else acc + ctx
        return acc

    # attn1: query = seq1, key/value = seq2.  attn2: query = seq2, key/value = seq1.
    a1 = mha(q1, k_from_s2, vfold_from_s2,
             batch_mask(len1 * batch, len2 * batch)) + bias[2:3, :emb]   # (L1*B, E)
    a2 = mha(q2, k_from_s1, vfold_from_s1,
             batch_mask(len2 * batch, len1 * batch)) + bias[3:4, :emb]   # (L2*B, E)

    # fc1: realise concat(a1, a2).reshape(B, (L1+L2)*E) as a lane-concatenate of the
    # per-position (B, E) slabs (position-major rows l*B:(l+1)*B), then ONE K=(L1+L2)*E
    # dot -- replaces the previous 14 tiny K=E dots with XLU/VPU filler + one MXU op.
    xs = ([a1[l * batch:(l + 1) * batch, :] for l in range(len1)]
          + [a2[l * batch:(l + 1) * batch, :] for l in range(len2)])
    x = jnp.concatenate(xs, axis=1)                       # (B, (L1+L2)*E)

    hid4 = w1_ref.shape[1]
    h1 = _gelu_exact(jnp.dot(x, w1_ref[...],
                             preferred_element_type=jnp.float32) + bias[4:5, :hid4])
    hid = w2_ref.shape[1]
    h2 = _gelu_exact(jnp.dot(h1, w2_ref[...],
                             preferred_element_type=jnp.float32) + bias[5:6, :hid])
    out_pad = w3_ref.shape[1]
    out = jnp.dot(h2, w3_ref[...],
                  preferred_element_type=jnp.float32) + bias[6:7, :out_pad]

    # Lane-dense (B, 128) stores; wrapper slices the real output columns.
    out_ref[...] = out.astype(out_ref.dtype)
    sig_ref[...] = jax.nn.sigmoid(out).astype(sig_ref.dtype)


# --------------------------- wrapper-side packing ----------------------------

def _round_up(x, m):
    return ((x + m - 1) // m) * m


def pack_params(params, seq_len1, seq_len2, num_heads):
    """One-time layout plumbing: pre-transpose / fold / pack all weights."""
    wq1, wk1, wv1, bq1, bk1, bv1, wo1, bo1 = params["attn1"]
    wq2, wk2, wv2, bq2, bk2, bv2, wo2, bo2 = params["attn2"]
    w1, b1, w2, b2, w3, b3 = params["fc"]

    emb = wq1.shape[0]
    hd = emb // num_heads
    scale = 1.0 / math.sqrt(hd)
    hid4 = w1.shape[0]
    hid = w2.shape[0]
    out_size = int(w3.shape[0])
    out_pad = _round_up(out_size, 128)          # lane-dense output stores

    def fold_vo(wv, bv, wo):
        # Per-head fold of the output projection into the V projection:
        #   v_fold_h = kv @ (Wv^T[:, h] @ Wo^T[h, :]) + bv[h] @ Wo^T[h, :]
        wvt, wot = wv.T, wo.T
        wblk, bblk = [], []
        for h in range(num_heads):
            sl = slice(h * hd, (h + 1) * hd)
            wblk.append(wvt[:, sl] @ wot[sl, :])          # (E, E)
            bblk.append(bv[:, sl] @ wot[sl, :])           # (1, E)
        return jnp.concatenate(wblk, axis=1), jnp.concatenate(bblk, axis=1)

    wvo1, bvo1 = fold_vo(wv1, bv1, wo1)   # attn1 value path (source = seq2)
    wvo2, bvo2 = fold_vo(wv2, bv2, wo2)   # attn2 value path (source = seq1)

    # seq1 feeds q of attn1 and k/v of attn2; seq2 feeds q of attn2 and k/v of attn1.
    # Softmax scale folded into the q projection (weights and bias).
    wp = jnp.stack([
        jnp.concatenate([wq1.T * scale, wk2.T, wvo2], axis=1),
        jnp.concatenate([wq2.T * scale, wk1.T, wvo1], axis=1),
    ])                                                            # (2, E, (2+H)*E)
    bp1 = jnp.concatenate([bq1 * scale, bk2, bvo2], axis=1)       # (1, (2+H)*E)
    bp2 = jnp.concatenate([bq2 * scale, bk1, bvo1], axis=1)

    pw = int(wp.shape[-1])
    bias_w = max(pw, hid4, hid, out_pad)

    def pad_row(v):
        v = v.reshape(1, -1)
        return jnp.zeros((1, bias_w), jnp.float32).at[:, :v.shape[1]].set(v)

    # Single packed bias operand:
    #   row 0/1: packed projection biases, row 2/3: bo1/bo2, rows 4-6: fc biases.
    biases = jnp.concatenate(
        [pad_row(bp1), pad_row(bp2), pad_row(bo1), pad_row(bo2),
         pad_row(b1), pad_row(b2), pad_row(b3)], axis=0)          # (7, bias_w)

    w3p = jnp.zeros((hid, out_pad), jnp.float32).at[:, :out_size].set(w3.T)

    packed = dict(wp=wp, biases=biases, w1t=w1.T, w2t=w2.T, w3p=w3p)
    return packed, out_size


# --------------------------------- forward ----------------------------------

@functools.partial(jax.jit, static_argnums=(3, 4))
def combined_nn_forward(seq1, seq2, packed, num_heads, out_size):
    b, l1, emb = seq1.shape
    _, l2, _ = seq2.shape

    # Position-major layout (rows = l*B + b): per-position (B, E) slabs are
    # contiguous sublane rows, so the in-kernel fc1 flatten is a cheap lane concat.
    s1 = jnp.transpose(seq1, (1, 0, 2)).reshape(l1 * b, emb)
    s2 = jnp.transpose(seq2, (1, 0, 2)).reshape(l2 * b, emb)

    hid4 = packed["w1t"].shape[1]
    hid = packed["w2t"].shape[1]
    out_pad = packed["w3p"].shape[1]
    pw = packed["wp"].shape[2]
    hd = emb // num_heads
    din = (l1 + l2) * emb

    # Advisory cost estimate for XLA scheduling around the custom call.
    flops = (2 * (l1 * b) * emb * pw + 2 * (l2 * b) * emb * pw
             + 2 * num_heads * (2 * (l1 * b) * (l2 * b) * hd
                                + 2 * (l1 * b) * (l2 * b) * emb)
             + 2 * b * din * hid4 + 2 * b * hid4 * hid + 2 * b * hid * out_pad)
    transcendentals = (2 * num_heads * (l1 * b) * (l2 * b)
                       + b * (hid4 + hid) + b * out_pad)
    bytes_accessed = 4 * (s1.size + s2.size + packed["wp"].size
                          + packed["biases"].size + packed["w1t"].size
                          + packed["w2t"].size + packed["w3p"].size
                          + 2 * b * out_pad)

    kernel = functools.partial(fused_combined_kernel, batch=b, len1=l1,
                               len2=l2, emb=emb, heads=num_heads)
    vmem = pltpu.MemorySpace.VMEM
    out_p, sig_p = pl.pallas_call(
        kernel,
        out_shape=(jax.ShapeDtypeStruct((b, out_pad), jnp.float32),
                   jax.ShapeDtypeStruct((b, out_pad), jnp.float32)),
        in_specs=[pl.BlockSpec(memory_space=vmem)] * 7,
        out_specs=(pl.BlockSpec(memory_space=vmem),
                   pl.BlockSpec(memory_space=vmem)),
        cost_estimate=pl.CostEstimate(flops=int(flops),
                                      transcendentals=int(transcendentals),
                                      bytes_accessed=int(bytes_accessed)),
    )(s1, s2, packed["wp"], packed["biases"],
      packed["w1t"], packed["w2t"], packed["w3p"])
    return out_p[:, :out_size], sig_p[:, :out_size]


# ----------------------------- parameter creation ---------------------------

def _xavier_uniform(key, shape):
    fan_out, fan_in = shape
    bound = math.sqrt(6.0 / (fan_in + fan_out))
    return jax.random.uniform(key, shape, jnp.float32, -bound, bound)


def _small_bias(key, n):
    return 0.02 * jax.random.normal(key, (1, n), jnp.float32)


def init_params(key, seq_len1, seq_len2, output_size, emb_dim, hidden_dim):
    ks = jax.random.split(key, 8)

    def attn_params(k):
        kk = jax.random.split(k, 8)
        return (
            _xavier_uniform(kk[0], (emb_dim, emb_dim)),   # Wq
            _xavier_uniform(kk[1], (emb_dim, emb_dim)),   # Wk
            _xavier_uniform(kk[2], (emb_dim, emb_dim)),   # Wv
            _small_bias(kk[3], emb_dim),                  # bq
            _small_bias(kk[4], emb_dim),                  # bk
            _small_bias(kk[5], emb_dim),                  # bv
            _xavier_uniform(kk[6], (emb_dim, emb_dim)),   # Wo
            _small_bias(kk[7], emb_dim),                  # bo
        )

    din = (seq_len1 + seq_len2) * hidden_dim
    fc = (
        _xavier_uniform(ks[2], (4 * hidden_dim, din)), _small_bias(ks[3], 4 * hidden_dim),
        _xavier_uniform(ks[4], (hidden_dim, 4 * hidden_dim)), _small_bias(ks[5], hidden_dim),
        _xavier_uniform(ks[6], (output_size, hidden_dim)), _small_bias(ks[7], output_size),
    )
    return {"attn1": attn_params(ks[0]), "attn2": attn_params(ks[1]), "fc": fc}


# ------------------------------ pure-JAX reference --------------------------

def _ref_mha(query, key_value, params, num_heads):
    wq, wk, wv, bq, bk, bv, wo, bo = params
    emb = query.shape[-1]
    hd = emb // num_heads
    q = query @ wq.T + bq
    k = key_value @ wk.T + bk
    v = key_value @ wv.T + bv
    b, lq, _ = q.shape
    lk = k.shape[1]
    qh = q.reshape(b, lq, num_heads, hd).transpose(0, 2, 1, 3)
    kh = k.reshape(b, lk, num_heads, hd).transpose(0, 2, 1, 3)
    vh = v.reshape(b, lk, num_heads, hd).transpose(0, 2, 1, 3)
    s = jnp.einsum("bhqd,bhkd->bhqk", qh, kh) / math.sqrt(hd)
    p = jax.nn.softmax(s, axis=-1)
    o = jnp.einsum("bhqk,bhkd->bhqd", p, vh).transpose(0, 2, 1, 3).reshape(b, lq, emb)
    return o @ wo.T + bo


def _ref_forward(seq1, seq2, params, num_heads):
    a1 = _ref_mha(seq1, seq2, params["attn1"], num_heads)
    a2 = _ref_mha(seq2, seq1, params["attn2"], num_heads)
    x = jnp.concatenate([a1, a2], axis=1).reshape(seq1.shape[0], -1)
    w1, b1, w2, b2, w3, b3 = params["fc"]
    h1 = _gelu_exact(x @ w1.T + b1)
    h2 = _gelu_exact(h1 @ w2.T + b2)
    out = h2 @ w3.T + b3
    return out, jax.nn.sigmoid(out)


# ------------------------------------ main -----------------------------------

if __name__ == "__main__":
    B, L1, L2 = 2, 8, 6
    EMB = 32            # emb_dim == hidden_dim (as implied by the fc input size)
    HIDDEN = 32
    HEADS = 4
    OUT = 4

    key = jax.random.PRNGKey(0)
    k_p, k_s1, k_s2 = jax.random.split(key, 3)
    params = init_params(k_p, L1, L2, OUT, EMB, HIDDEN)
    seq1 = jax.random.normal(k_s1, (B, L1, EMB), jnp.float32)
    seq2 = jax.random.normal(k_s2, (B, L2, EMB), jnp.float32)

    packed, out_size = pack_params(params, L1, L2, HEADS)

    out, normalized_out = combined_nn_forward(seq1, seq2, packed, HEADS, out_size)
    out = jax.block_until_ready(out)
    normalized_out = jax.block_until_ready(normalized_out)

    ref_out, ref_sig = _ref_forward(seq1, seq2, params, HEADS)
    assert out.shape == (B, OUT) and normalized_out.shape == (B, OUT)
    assert jnp.allclose(out, ref_out, atol=1e-4, rtol=1e-4)
    assert jnp.allclose(normalized_out, ref_sig, atol=1e-4, rtol=1e-4)

    print("KERNEL_OK")
</pallas_src>

<mosaic_0001>
module attributes {stable_mosaic.version = 11 : i64} {
  func.func @fused_combined_kernel(%arg0: memref<16x32xf32, #tpu.memory_space<vmem>>, %arg1: memref<12x32xf32, #tpu.memory_space<vmem>>, %arg2: memref<2x32x192xf32, #tpu.memory_space<vmem>>, %arg3: memref<7x192xf32, #tpu.memory_space<vmem>>, %arg4: memref<448x128xf32, #tpu.memory_space<vmem>>, %arg5: memref<128x32xf32, #tpu.memory_space<vmem>>, %arg6: memref<32x128xf32, #tpu.memory_space<vmem>>, %arg7: memref<2x128xf32, #tpu.memory_space<vmem>>, %arg8: memref<2x128xf32, #tpu.memory_space<vmem>>) attributes {dimension_semantics = [], scalar_prefetch = 0 : i64, scratch_operands = 0 : i64, tpu.core_type = #tpu.core_type<tc>} {
    %c0 = arith.constant 0 : index
    %c0_0 = arith.constant 0 : index
    %0 = vector.load %arg0[%c0, %c0_0] : memref<16x32xf32, #tpu.memory_space<vmem>>, vector<16x32xf32>
    %c0_1 = arith.constant 0 : index
    %c0_2 = arith.constant 0 : index
    %1 = vector.load %arg1[%c0_1, %c0_2] : memref<12x32xf32, #tpu.memory_space<vmem>>, vector<12x32xf32>
    %c0_3 = arith.constant 0 : index
    %c0_4 = arith.constant 0 : index
    %2 = vector.load %arg3[%c0_3, %c0_4] : memref<7x192xf32, #tpu.memory_space<vmem>>, vector<7x192xf32>
    %c0_5 = arith.constant 0 : index
    %c0_6 = arith.constant 0 : index
    %c0_7 = arith.constant 0 : index
    %3 = vector.load %arg2[%c0_5, %c0_6, %c0_7] : memref<2x32x192xf32, #tpu.memory_space<vmem>>, vector<1x32x192xf32>
    %4 = vector.shape_cast %3 : vector<1x32x192xf32> to vector<32x192xf32>
    %cst = arith.constant dense<0.000000e+00> : vector<16x192xf32>
    %5 = tpu.matmul %0, %4, %cst {dimension_numbers = #tpu.dot_dimension_numbers<[1], [0], [0], [1], [0, 0, 1, 1], [], []>} : vector<16x32xf32>, vector<32x192xf32>, vector<16x192xf32> -> vector<16x192xf32>
    %6 = vector.extract_strided_slice %2 {offsets = [0, 0], sizes = [1, 192], strides = [1, 1]} : vector<7x192xf32> to vector<1x192xf32>
    %7 = vector.broadcast %6 : vector<1x192xf32> to vector<16x192xf32>
    %8 = arith.addf %5, %7 : vector<16x192xf32>
    %c1 = arith.constant 1 : index
    %c0_8 = arith.constant 0 : index
    %c0_9 = arith.constant 0 : index
    %9 = vector.load %arg2[%c1, %c0_8, %c0_9] : memref<2x32x192xf32, #tpu.memory_space<vmem>>, vector<1x32x192xf32>
    %10 = vector.shape_cast %9 : vector<1x32x192xf32> to vector<32x192xf32>
    %cst_10 = arith.constant dense<0.000000e+00> : vector<12x192xf32>
    %11 = tpu.matmul %1, %10, %cst_10 {dimension_numbers = #tpu.dot_dimension_numbers<[1], [0], [0], [1], [0, 0, 1, 1], [], []>} : vector<12x32xf32>, vector<32x192xf32>, vector<12x192xf32> -> vector<12x192xf32>
    %12 = vector.extract_strided_slice %2 {offsets = [1, 0], sizes = [1, 192], strides = [1, 1]} : vector<7x192xf32> to vector<1x192xf32>
    %13 = vector.broadcast %12 : vector<1x192xf32> to vector<12x192xf32>
    %14 = arith.addf %11, %13 : vector<12x192xf32>
    %15 = vector.extract_strided_slice %8 {offsets = [0, 0], sizes = [16, 32], strides = [1, 1]} : vector<16x192xf32> to vector<16x32xf32>
    %16 = vector.extract_strided_slice %8 {offsets = [0, 32], sizes = [16, 32], strides = [1, 1]} : vector<16x192xf32> to vector<16x32xf32>
    %17 = vector.extract_strided_slice %8 {offsets = [0, 64], sizes = [16, 128], strides = [1, 1]} : vector<16x192xf32> to vector<16x128xf32>
    %18 = vector.extract_strided_slice %14 {offsets = [0, 0], sizes = [12, 32], strides = [1, 1]} : vector<12x192xf32> to vector<12x32xf32>
    %19 = vector.extract_strided_slice %14 {offsets = [0, 32], sizes = [12, 32], strides = [1, 1]} : vector<12x192xf32> to vector<12x32xf32>
    %20 = vector.extract_strided_slice %14 {offsets = [0, 64], sizes = [12, 128], strides = [1, 1]} : vector<12x192xf32> to vector<12x128xf32>
    %21 = tpu.iota {dimensions = array<i32: 0>} : vector<16x12xi32>
    %c2_i32 = arith.constant 2 : i32
    %c0_i32 = arith.constant 0 : i32
    %22 = arith.cmpi eq, %c2_i32, %c0_i32 : i32
    %c1_i32 = arith.constant 1 : i32
    %23 = arith.select %22, %c1_i32, %c2_i32 : i32
    %24 = vector.broadcast %23 : i32 to vector<16x12xi32>
    %25 = arith.remsi %21, %24 : vector<16x12xi32>
    %c0_i32_11 = arith.constant 0 : i32
    %26 = vector.broadcast %c0_i32_11 : i32 to vector<16x12xi32>
    %27 = arith.cmpi ne, %25, %26 : vector<16x12xi32>
    %c0_i32_12 = arith.constant 0 : i32
    %28 = vector.broadcast %c0_i32_12 : i32 to vector<16x12xi32>
    %29 = arith.cmpi slt, %25, %28 : vector<16x12xi32>
    %c0_i32_13 = arith.constant 0 : i32
    %30 = arith.cmpi slt, %23, %c0_i32_13 : i32
    %31 = vector.broadcast %30 : i1 to vector<16x12xi1>
    %32 = vector.broadcast %31 : vector<16x12xi1> to vector<16x12xi1>
    %33 = arith.xori %29, %32 : vector<16x12xi1>
    %34 = arith.andi %33, %27 : vector<16x12xi1>
    %35 = vector.broadcast %23 : i32 to vector<16x12xi32>
    %36 = arith.addi %25, %35 : vector<16x12xi32>
    %37 = arith.select %34, %36, %25 : vector<16x12xi1>, vector<16x12xi32>
    %38 = tpu.iota {dimensions = array<i32: 1>} : vector<16x12xi32>
    %c2_i32_14 = arith.constant 2 : i32
    %c0_i32_15 = arith.constant 0 : i32
    %39 = arith.cmpi eq, %c2_i32_14, %c0_i32_15 : i32
    %c1_i32_16 = arith.constant 1 : i32
    %40 = arith.select %39, %c1_i32_16, %c2_i32_14 : i32
    %41 = vector.broadcast %40 : i32 to vector<16x12xi32>
    %42 = arith.remsi %38, %41 : vector<16x12xi32>
    %c0_i32_17 = arith.constant 0 : i32
    %43 = vector.broadcast %c0_i32_17 : i32 to vector<16x12xi32>
    %44 = arith.cmpi ne, %42, %43 : vector<16x12xi32>
    %c0_i32_18 = arith.constant 0 : i32
    %45 = vector.broadcast %c0_i32_18 : i32 to vector<16x12xi32>
    %46 = arith.cmpi slt, %42, %45 : vector<16x12xi32>
    %c0_i32_19 = arith.constant 0 : i32
    %47 = arith.cmpi slt, %40, %c0_i32_19 : i32
    %48 = vector.broadcast %47 : i1 to vector<16x12xi1>
    %49 = vector.broadcast %48 : vector<16x12xi1> to vector<16x12xi1>
    %50 = arith.xori %46, %49 : vector<16x12xi1>
    %51 = arith.andi %50, %44 : vector<16x12xi1>
    %52 = vector.broadcast %40 : i32 to vector<16x12xi32>
    %53 = arith.addi %42, %52 : vector<16x12xi32>
    %54 = arith.select %51, %53, %42 : vector<16x12xi1>, vector<16x12xi32>
    %55 = arith.cmpi eq, %37, %54 : vector<16x12xi32>
    %cst_20 = arith.constant 0.000000e+00 : f32
    %cst_21 = arith.constant -1.000000e+30 : f32
    %56 = vector.broadcast %cst_20 : f32 to vector<16x12xf32>
    %57 = vector.broadcast %cst_21 : f32 to vector<16x12xf32>
    %58 = arith.select %55, %56, %57 : vector<16x12xi1>, vector<16x12xf32>
    %59 = vector.extract_strided_slice %15 {offsets = [0, 0], sizes = [16, 8], strides = [1, 1]} : vector<16x32xf32> to vector<16x8xf32>
    %60 = vector.extract_strided_slice %19 {offsets = [0, 0], sizes = [12, 8], strides = [1, 1]} : vector<12x32xf32> to vector<12x8xf32>
    %cst_22 = arith.constant dense<0.000000e+00> : vector<16x12xf32>
    %61 = tpu.matmul %59, %60, %cst_22 {dimension_numbers = #tpu.dot_dimension_numbers<[1], [1], [0], [0], [0, 0, 1, 0], [], []>} : vector<16x8xf32>, vector<12x8xf32>, vector<16x12xf32> -> vector<16x12xf32>
    %62 = arith.addf %61, %58 : vector<16x12xf32>
    %cst_23 = arith.constant dense<0xFF800000> : vector<16xf32>
    %63 = vector.multi_reduction <maximumf>, %62, %cst_23 [1] : vector<16x12xf32> to vector<16xf32>
    %64 = vector.shape_cast %63 : vector<16xf32> to vector<16x1xf32>
    %65 = vector.broadcast %64 : vector<16x1xf32> to vector<16x12xf32>
    %66 = arith.subf %62, %65 : vector<16x12xf32>
    %67 = math.exp %66 : vector<16x12xf32>
    %cst_24 = arith.constant dense<0.000000e+00> : vector<16xf32>
    %68 = vector.multi_reduction <add>, %67, %cst_24 [1] : vector<16x12xf32> to vector<16xf32>
    %69 = vector.shape_cast %68 : vector<16xf32> to vector<16x1xf32>
    %70 = vector.broadcast %69 : vector<16x1xf32> to vector<16x12xf32>
    %71 = arith.divf %67, %70 : vector<16x12xf32>
    %72 = vector.extract_strided_slice %20 {offsets = [0, 0], sizes = [12, 32], strides = [1, 1]} : vector<12x128xf32> to vector<12x32xf32>
    %cst_25 = arith.constant dense<0.000000e+00> : vector<16x32xf32>
    %73 = tpu.matmul %71, %72, %cst_25 {dimension_numbers = #tpu.dot_dimension_numbers<[1], [0], [0], [1], [0, 0, 1, 1], [], []>} : vector<16x12xf32>, vector<12x32xf32>, vector<16x32xf32> -> vector<16x32xf32>
    %74 = vector.extract_strided_slice %15 {offsets = [0, 8], sizes = [16, 8], strides = [1, 1]} : vector<16x32xf32> to vector<16x8xf32>
    %75 = vector.extract_strided_slice %19 {offsets = [0, 8], sizes = [12, 8], strides = [1, 1]} : vector<12x32xf32> to vector<12x8xf32>
    %cst_26 = arith.constant dense<0.000000e+00> : vector<16x12xf32>
    %76 = tpu.matmul %74, %75, %cst_26 {dimension_numbers = #tpu.dot_dimension_numbers<[1], [1], [0], [0], [0, 0, 1, 0], [], []>} : vector<16x8xf32>, vector<12x8xf32>, vector<16x12xf32> -> vector<16x12xf32>
    %77 = arith.addf %76, %58 : vector<16x12xf32>
    %cst_27 = arith.constant dense<0xFF800000> : vector<16xf32>
    %78 = vector.multi_reduction <maximumf>, %77, %cst_27 [1] : vector<16x12xf32> to vector<16xf32>
    %79 = vector.shape_cast %78 : vector<16xf32> to vector<16x1xf32>
    %80 = vector.broadcast %79 : vector<16x1xf32> to vector<16x12xf32>
    %81 = arith.subf %77, %80 : vector<16x12xf32>
    %82 = math.exp %81 : vector<16x12xf32>
    %cst_28 = arith.constant dense<0.000000e+00> : vector<16xf32>
    %83 = vector.multi_reduction <add>, %82, %cst_28 [1] : vector<16x12xf32> to vector<16xf32>
    %84 = vector.shape_cast %83 : vector<16xf32> to vector<16x1xf32>
    %85 = vector.broadcast %84 : vector<16x1xf32> to vector<16x12xf32>
    %86 = arith.divf %82, %85 : vector<16x12xf32>
    %87 = vector.extract_strided_slice %20 {offsets = [0, 32], sizes = [12, 32], strides = [1, 1]} : vector<12x128xf32> to vector<12x32xf32>
    %cst_29 = arith.constant dense<0.000000e+00> : vector<16x32xf32>
    %88 = tpu.matmul %86, %87, %cst_29 {dimension_numbers = #tpu.dot_dimension_numbers<[1], [0], [0], [1], [0, 0, 1, 1], [], []>} : vector<16x12xf32>, vector<12x32xf32>, vector<16x32xf32> -> vector<16x32xf32>
    %89 = arith.addf %73, %88 : vector<16x32xf32>
    %90 = vector.extract_strided_slice %15 {offsets = [0, 16], sizes = [16, 8], strides = [1, 1]} : vector<16x32xf32> to vector<16x8xf32>
    %91 = vector.extract_strided_slice %19 {offsets = [0, 16], sizes = [12, 8], strides = [1, 1]} : vector<12x32xf32> to vector<12x8xf32>
    %cst_30 = arith.constant dense<0.000000e+00> : vector<16x12xf32>
    %92 = tpu.matmul %90, %91, %cst_30 {dimension_numbers = #tpu.dot_dimension_numbers<[1], [1], [0], [0], [0, 0, 1, 0], [], []>} : vector<16x8xf32>, vector<12x8xf32>, vector<16x12xf32> -> vector<16x12xf32>
    %93 = arith.addf %92, %58 : vector<16x12xf32>
    %cst_31 = arith.constant dense<0xFF800000> : vector<16xf32>
    %94 = vector.multi_reduction <maximumf>, %93, %cst_31 [1] : vector<16x12xf32> to vector<16xf32>
    %95 = vector.shape_cast %94 : vector<16xf32> to vector<16x1xf32>
    %96 = vector.broadcast %95 : vector<16x1xf32> to vector<16x12xf32>
    %97 = arith.subf %93, %96 : vector<16x12xf32>
    %98 = math.exp %97 : vector<16x12xf32>
    %cst_32 = arith.constant dense<0.000000e+00> : vector<16xf32>
    %99 = vector.multi_reduction <add>, %98, %cst_32 [1] : vector<16x12xf32> to vector<16xf32>
    %100 = vector.shape_cast %99 : vector<16xf32> to vector<16x1xf32>
    %101 = vector.broadcast %100 : vector<16x1xf32> to vector<16x12xf32>
    %102 = arith.divf %98, %101 : vector<16x12xf32>
    %103 = vector.extract_strided_slice %20 {offsets = [0, 64], sizes = [12, 32], strides = [1, 1]} : vector<12x128xf32> to vector<12x32xf32>
    %cst_33 = arith.constant dense<0.000000e+00> : vector<16x32xf32>
    %104 = tpu.matmul %102, %103, %cst_33 {dimension_numbers = #tpu.dot_dimension_numbers<[1], [0], [0], [1], [0, 0, 1, 1], [], []>} : vector<16x12xf32>, vector<12x32xf32>, vector<16x32xf32> -> vector<16x32xf32>
    %105 = arith.addf %89, %104 : vector<16x32xf32>
    %106 = vector.extract_strided_slice %15 {offsets = [0, 24], sizes = [16, 8], strides = [1, 1]} : vector<16x32xf32> to vector<16x8xf32>
    %107 = vector.extract_strided_slice %19 {offsets = [0, 24], sizes = [12, 8], strides = [1, 1]} : vector<12x32xf32> to vector<12x8xf32>
    %cst_34 = arith.constant dense<0.000000e+00> : vector<16x12xf32>
    %108 = tpu.matmul %106, %107, %cst_34 {dimension_numbers = #tpu.dot_dimension_numbers<[1], [1], [0], [0], [0, 0, 1, 0], [], []>} : vector<16x8xf32>, vector<12x8xf32>, vector<16x12xf32> -> vector<16x12xf32>
    %109 = arith.addf %108, %58 : vector<16x12xf32>
    %cst_35 = arith.constant dense<0xFF800000> : vector<16xf32>
    %110 = vector.multi_reduction <maximumf>, %109, %cst_35 [1] : vector<16x12xf32> to vector<16xf32>
    %111 = vector.shape_cast %110 : vector<16xf32> to vector<16x1xf32>
    %112 = vector.broadcast %111 : vector<16x1xf32> to vector<16x12xf32>
    %113 = arith.subf %109, %112 : vector<16x12xf32>
    %114 = math.exp %113 : vector<16x12xf32>
    %cst_36 = arith.constant dense<0.000000e+00> : vector<16xf32>
    %115 = vector.multi_reduction <add>, %114, %cst_36 [1] : vector<16x12xf32> to vector<16xf32>
    %116 = vector.shape_cast %115 : vector<16xf32> to vector<16x1xf32>
    %117 = vector.broadcast %116 : vector<16x1xf32> to vector<16x12xf32>
    %118 = arith.divf %114, %117 : vector<16x12xf32>
    %119 = vector.extract_strided_slice %20 {offsets = [0, 96], sizes = [12, 32], strides = [1, 1]} : vector<12x128xf32> to vector<12x32xf32>
    %cst_37 = arith.constant dense<0.000000e+00> : vector<16x32xf32>
    %120 = tpu.matmul %118, %119, %cst_37 {dimension_numbers = #tpu.dot_dimension_numbers<[1], [0], [0], [1], [0, 0, 1, 1], [], []>} : vector<16x12xf32>, vector<12x32xf32>, vector<16x32xf32> -> vector<16x32xf32>
    %121 = arith.addf %105, %120 : vector<16x32xf32>
    %122 = vector.extract_strided_slice %2 {offsets = [2, 0], sizes = [1, 32], strides = [1, 1]} : vector<7x192xf32> to vector<1x32xf32>
    %123 = vector.broadcast %122 : vector<1x32xf32> to vector<16x32xf32>
    %124 = arith.addf %121, %123 : vector<16x32xf32>
    %125 = tpu.iota {dimensions = array<i32: 0>} : vector<12x16xi32>
    %c2_i32_38 = arith.constant 2 : i32
    %c0_i32_39 = arith.constant 0 : i32
    %126 = arith.cmpi eq, %c2_i32_38, %c0_i32_39 : i32
    %c1_i32_40 = arith.constant 1 : i32
    %127 = arith.select %126, %c1_i32_40, %c2_i32_38 : i32
    %128 = vector.broadcast %127 : i32 to vector<12x16xi32>
    %129 = arith.remsi %125, %128 : vector<12x16xi32>
    %c0_i32_41 = arith.constant 0 : i32
    %130 = vector.broadcast %c0_i32_41 : i32 to vector<12x16xi32>
    %131 = arith.cmpi ne, %129, %130 : vector<12x16xi32>
    %c0_i32_42 = arith.constant 0 : i32
    %132 = vector.broadcast %c0_i32_42 : i32 to vector<12x16xi32>
    %133 = arith.cmpi slt, %129, %132 : vector<12x16xi32>
    %c0_i32_43 = arith.constant 0 : i32
    %134 = arith.cmpi slt, %127, %c0_i32_43 : i32
    %135 = vector.broadcast %134 : i1 to vector<12x16xi1>
    %136 = vector.broadcast %135 : vector<12x16xi1> to vector<12x16xi1>
    %137 = arith.xori %133, %136 : vector<12x16xi1>
    %138 = arith.andi %137, %131 : vector<12x16xi1>
    %139 = vector.broadcast %127 : i32 to vector<12x16xi32>
    %140 = arith.addi %129, %139 : vector<12x16xi32>
    %141 = arith.select %138, %140, %129 : vector<12x16xi1>, vector<12x16xi32>
    %142 = tpu.iota {dimensions = array<i32: 1>} : vector<12x16xi32>
    %c2_i32_44 = arith.constant 2 : i32
    %c0_i32_45 = arith.constant 0 : i32
    %143 = arith.cmpi eq, %c2_i32_44, %c0_i32_45 : i32
    %c1_i32_46 = arith.constant 1 : i32
    %144 = arith.select %143, %c1_i32_46, %c2_i32_44 : i32
    %145 = vector.broadcast %144 : i32 to vector<12x16xi32>
    %146 = arith.remsi %142, %145 : vector<12x16xi32>
    %c0_i32_47 = arith.constant 0 : i32
    %147 = vector.broadcast %c0_i32_47 : i32 to vector<12x16xi32>
    %148 = arith.cmpi ne, %146, %147 : vector<12x16xi32>
    %c0_i32_48 = arith.constant 0 : i32
    %149 = vector.broadcast %c0_i32_48 : i32 to vector<12x16xi32>
    %150 = arith.cmpi slt, %146, %149 : vector<12x16xi32>
    %c0_i32_49 = arith.constant 0 : i32
    %151 = arith.cmpi slt, %144, %c0_i32_49 : i32
    %152 = vector.broadcast %151 : i1 to vector<12x16xi1>
    %153 = vector.broadcast %152 : vector<12x16xi1> to vector<12x16xi1>
    %154 = arith.xori %150, %153 : vector<12x16xi1>
    %155 = arith.andi %154, %148 : vector<12x16xi1>
    %156 = vector.broadcast %144 : i32 to vector<12x16xi32>
    %157 = arith.addi %146, %156 : vector<12x16xi32>
    %158 = arith.select %155, %157, %146 : vector<12x16xi1>, vector<12x16xi32>
    %159 = arith.cmpi eq, %141, %158 : vector<12x16xi32>
    %cst_50 = arith.constant 0.000000e+00 : f32
    %cst_51 = arith.constant -1.000000e+30 : f32
    %160 = vector.broadcast %cst_50 : f32 to vector<12x16xf32>
    %161 = vector.broadcast %cst_51 : f32 to vector<12x16xf32>
    %162 = arith.select %159, %160, %161 : vector<12x16xi1>, vector<12x16xf32>
    %163 = vector.extract_strided_slice %18 {offsets = [0, 0], sizes = [12, 8], strides = [1, 1]} : vector<12x32xf32> to vector<12x8xf32>
    %164 = vector.extract_strided_slice %16 {offsets = [0, 0], sizes = [16, 8], strides = [1, 1]} : vector<16x32xf32> to vector<16x8xf32>
    %cst_52 = arith.constant dense<0.000000e+00> : vector<12x16xf32>
    %165 = tpu.matmul %163, %164, %cst_52 {dimension_numbers = #tpu.dot_dimension_numbers<[1], [1], [0], [0], [0, 0, 1, 0], [], []>} : vector<12x8xf32>, vector<16x8xf32>, vector<12x16xf32> -> vector<12x16xf32>
    %166 = arith.addf %165, %162 : vector<12x16xf32>
    %cst_53 = arith.constant dense<0xFF800000> : vector<12xf32>
    %167 = vector.multi_reduction <maximumf>, %166, %cst_53 [1] : vector<12x16xf32> to vector<12xf32>
    %168 = vector.shape_cast %167 : vector<12xf32> to vector<12x1xf32>
    %169 = vector.broadcast %168 : vector<12x1xf32> to vector<12x16xf32>
    %170 = arith.subf %166, %169 : vector<12x16xf32>
    %171 = math.exp %170 : vector<12x16xf32>
    %cst_54 = arith.constant dense<0.000000e+00> : vector<12xf32>
    %172 = vector.multi_reduction <add>, %171, %cst_54 [1] : vector<12x16xf32> to vector<12xf32>
    %173 = vector.shape_cast %172 : vector<12xf32> to vector<12x1xf32>
    %174 = vector.broadcast %173 : vector<12x1xf32> to vector<12x16xf32>
    %175 = arith.divf %171, %174 : vector<12x16xf32>
    %176 = vector.extract_strided_slice %17 {offsets = [0, 0], sizes = [16, 32], strides = [1, 1]} : vector<16x128xf32> to vector<16x32xf32>
    %cst_55 = arith.constant dense<0.000000e+00> : vector<12x32xf32>
    %177 = tpu.matmul %175, %176, %cst_55 {dimension_numbers = #tpu.dot_dimension_numbers<[1], [0], [0], [1], [0, 0, 1, 1], [], []>} : vector<12x16xf32>, vector<16x32xf32>, vector<12x32xf32> -> vector<12x32xf32>
    %178 = vector.extract_strided_slice %18 {offsets = [0, 8], sizes = [12, 8], strides = [1, 1]} : vector<12x32xf32> to vector<12x8xf32>
    %179 = vector.extract_strided_slice %16 {offsets = [0, 8], sizes = [16, 8], strides = [1, 1]} : vector<16x32xf32> to vector<16x8xf32>
    %cst_56 = arith.constant dense<0.000000e+00> : vector<12x16xf32>
    %180 = tpu.matmul %178, %179, %cst_56 {dimension_numbers = #tpu.dot_dimension_numbers<[1], [1], [0], [0], [0, 0, 1, 0], [], []>} : vector<12x8xf32>, vector<16x8xf32>, vector<12x16xf32> -> vector<12x16xf32>
    %181 = arith.addf %180, %162 : vector<12x16xf32>
    %cst_57 = arith.constant dense<0xFF800000> : vector<12xf32>
    %182 = vector.multi_reduction <maximumf>, %181, %cst_57 [1] : vector<12x16xf32> to vector<12xf32>
    %183 = vector.shape_cast %182 : vector<12xf32> to vector<12x1xf32>
    %184 = vector.broadcast %183 : vector<12x1xf32> to vector<12x16xf32>
    %185 = arith.subf %181, %184 : vector<12x16xf32>
    %186 = math.exp %185 : vector<12x16xf32>
    %cst_58 = arith.constant dense<0.000000e+00> : vector<12xf32>
    %187 = vector.multi_reduction <add>, %186, %cst_58 [1] : vector<12x16xf32> to vector<12xf32>
    %188 = vector.shape_cast %187 : vector<12xf32> to vector<12x1xf32>
    %189 = vector.broadcast %188 : vector<12x1xf32> to vector<12x16xf32>
    %190 = arith.divf %186, %189 : vector<12x16xf32>
    %191 = vector.extract_strided_slice %17 {offsets = [0, 32], sizes = [16, 32], strides = [1, 1]} : vector<16x128xf32> to vector<16x32xf32>
    %cst_59 = arith.constant dense<0.000000e+00> : vector<12x32xf32>
    %192 = tpu.matmul %190, %191, %cst_59 {dimension_numbers = #tpu.dot_dimension_numbers<[1], [0], [0], [1], [0, 0, 1, 1], [], []>} : vector<12x16xf32>, vector<16x32xf32>, vector<12x32xf32> -> vector<12x32xf32>
    %193 = arith.addf %177, %192 : vector<12x32xf32>
    %194 = vector.extract_strided_slice %18 {offsets = [0, 16], sizes = [12, 8], strides = [1, 1]} : vector<12x32xf32> to vector<12x8xf32>
    %195 = vector.extract_strided_slice %16 {offsets = [0, 16], sizes = [16, 8], strides = [1, 1]} : vector<16x32xf32> to vector<16x8xf32>
    %cst_60 = arith.constant dense<0.000000e+00> : vector<12x16xf32>
    %196 = tpu.matmul %194, %195, %cst_60 {dimension_numbers = #tpu.dot_dimension_numbers<[1], [1], [0], [0], [0, 0, 1, 0], [], []>} : vector<12x8xf32>, vector<16x8xf32>, vector<12x16xf32> -> vector<12x16xf32>
    %197 = arith.addf %196, %162 : vector<12x16xf32>
    %cst_61 = arith.constant dense<0xFF800000> : vector<12xf32>
    %198 = vector.multi_reduction <maximumf>, %197, %cst_61 [1] : vector<12x16xf32> to vector<12xf32>
    %199 = vector.shape_cast %198 : vector<12xf32> to vector<12x1xf32>
    %200 = vector.broadcast %199 : vector<12x1xf32> to vector<12x16xf32>
    %201 = arith.subf %197, %200 : vector<12x16xf32>
    %202 = math.exp %201 : vector<12x16xf32>
    %cst_62 = arith.constant dense<0.000000e+00> : vector<12xf32>
    %203 = vector.multi_reduction <add>, %202, %cst_62 [1] : vector<12x16xf32> to vector<12xf32>
    %204 = vector.shape_cast %203 : vector<12xf32> to vector<12x1xf32>
    %205 = vector.broadcast %204 : vector<12x1xf32> to vector<12x16xf32>
    %206 = arith.divf %202, %205 : vector<12x16xf32>
    %207 = vector.extract_strided_slice %17 {offsets = [0, 64], sizes = [16, 32], strides = [1, 1]} : vector<16x128xf32> to vector<16x32xf32>
    %cst_63 = arith.constant dense<0.000000e+00> : vector<12x32xf32>
    %208 = tpu.matmul %206, %207, %cst_63 {dimension_numbers = #tpu.dot_dimension_numbers<[1], [0], [0], [1], [0, 0, 1, 1], [], []>} : vector<12x16xf32>, vector<16x32xf32>, vector<12x32xf32> -> vector<12x32xf32>
    %209 = arith.addf %193, %208 : vector<12x32xf32>
    %210 = vector.extract_strided_slice %18 {offsets = [0, 24], sizes = [12, 8], strides = [1, 1]} : vector<12x32xf32> to vector<12x8xf32>
    %211 = vector.extract_strided_slice %16 {offsets = [0, 24], sizes = [16, 8], strides = [1, 1]} : vector<16x32xf32> to vector<16x8xf32>
    %cst_64 = arith.constant dense<0.000000e+00> : vector<12x16xf32>
    %212 = tpu.matmul %210, %211, %cst_64 {dimension_numbers = #tpu.dot_dimension_numbers<[1], [1], [0], [0], [0, 0, 1, 0], [], []>} : vector<12x8xf32>, vector<16x8xf32>, vector<12x16xf32> -> vector<12x16xf32>
    %213 = arith.addf %212, %162 : vector<12x16xf32>
    %cst_65 = arith.constant dense<0xFF800000> : vector<12xf32>
    %214 = vector.multi_reduction <maximumf>, %213, %cst_65 [1] : vector<12x16xf32> to vector<12xf32>
    %215 = vector.shape_cast %214 : vector<12xf32> to vector<12x1xf32>
    %216 = vector.broadcast %215 : vector<12x1xf32> to vector<12x16xf32>
    %217 = arith.subf %213, %216 : vector<12x16xf32>
    %218 = math.exp %217 : vector<12x16xf32>
    %cst_66 = arith.constant dense<0.000000e+00> : vector<12xf32>
    %219 = vector.multi_reduction <add>, %218, %cst_66 [1] : vector<12x16xf32> to vector<12xf32>
    %220 = vector.shape_cast %219 : vector<12xf32> to vector<12x1xf32>
    %221 = vector.broadcast %220 : vector<12x1xf32> to vector<12x16xf32>
    %222 = arith.divf %218, %221 : vector<12x16xf32>
    %223 = vector.extract_strided_slice %17 {offsets = [0, 96], sizes = [16, 32], strides = [1, 1]} : vector<16x128xf32> to vector<16x32xf32>
    %cst_67 = arith.constant dense<0.000000e+00> : vector<12x32xf32>
    %224 = tpu.matmul %222, %223, %cst_67 {dimension_numbers = #tpu.dot_dimension_numbers<[1], [0], [0], [1], [0, 0, 1, 1], [], []>} : vector<12x16xf32>, vector<16x32xf32>, vector<12x32xf32> -> vector<12x32xf32>
    %225 = arith.addf %209, %224 : vector<12x32xf32>
    %226 = vector.extract_strided_slice %2 {offsets = [3, 0], sizes = [1, 32], strides = [1, 1]} : vector<7x192xf32> to vector<1x32xf32>
    %227 = vector.broadcast %226 : vector<1x32xf32> to vector<12x32xf32>
    %228 = arith.addf %225, %227 : vector<12x32xf32>
    %229 = vector.extract_strided_slice %124 {offsets = [0, 0], sizes = [2, 32], strides = [1, 1]} : vector<16x32xf32> to vector<2x32xf32>
    %230 = vector.extract_strided_slice %124 {offsets = [2, 0], sizes = [2, 32], strides = [1, 1]} : vector<16x32xf32> to vector<2x32xf32>
    %231 = vector.extract_strided_slice %124 {offsets = [4, 0], sizes = [2, 32], strides = [1, 1]} : vector<16x32xf32> to vector<2x32xf32>
    %232 = vector.extract_strided_slice %124 {offsets = [6, 0], sizes = [2, 32], strides = [1, 1]} : vector<16x32xf32> to vector<2x32xf32>
    %233 = vector.extract_strided_slice %124 {offsets = [8, 0], sizes = [2, 32], strides = [1, 1]} : vector<16x32xf32> to vector<2x32xf32>
    %234 = vector.extract_strided_slice %124 {offsets = [10, 0], sizes = [2, 32], strides = [1, 1]} : vector<16x32xf32> to vector<2x32xf32>
    %235 = vector.extract_strided_slice %124 {offsets = [12, 0], sizes = [2, 32], strides = [1, 1]} : vector<16x32xf32> to vector<2x32xf32>
    %236 = vector.extract_strided_slice %124 {offsets = [14, 0], sizes = [2, 32], strides = [1, 1]} : vector<16x32xf32> to vector<2x32xf32>
    %237 = vector.extract_strided_slice %228 {offsets = [0, 0], sizes = [2, 32], strides = [1, 1]} : vector<12x32xf32> to vector<2x32xf32>
    %238 = vector.extract_strided_slice %228 {offsets = [2, 0], sizes = [2, 32], strides = [1, 1]} : vector<12x32xf32> to vector<2x32xf32>
    %239 = vector.extract_strided_slice %228 {offsets = [4, 0], sizes = [2, 32], strides = [1, 1]} : vector<12x32xf32> to vector<2x32xf32>
    %240 = vector.extract_strided_slice %228 {offsets = [6, 0], sizes = [2, 32], strides = [1, 1]} : vector<12x32xf32> to vector<2x32xf32>
    %241 = vector.extract_strided_slice %228 {offsets = [8, 0], sizes = [2, 32], strides = [1, 1]} : vector<12x32xf32> to vector<2x32xf32>
    %242 = vector.extract_strided_slice %228 {offsets = [10, 0], sizes = [2, 32], strides = [1, 1]} : vector<12x32xf32> to vector<2x32xf32>
    %243 = tpu.concatenate %229, %230, %231, %232, %233, %234, %235, %236, %237, %238, %239, %240, %241, %242 in 1 : vector<2x32xf32>, vector<2x32xf32>, vector<2x32xf32>, vector<2x32xf32>, vector<2x32xf32>, vector<2x32xf32>, vector<2x32xf32>, vector<2x32xf32>, vector<2x32xf32>, vector<2x32xf32>, vector<2x32xf32>, vector<2x32xf32>, vector<2x32xf32>, vector<2x32xf32> -> vector<2x448xf32>
    %c0_68 = arith.constant 0 : index
    %c0_69 = arith.constant 0 : index
    %244 = vector.load %arg4[%c0_68, %c0_69] : memref<448x128xf32, #tpu.memory_space<vmem>>, vector<448x128xf32>
    %cst_70 = arith.constant dense<0.000000e+00> : vector<2x128xf32>
    %245 = tpu.matmul %243, %244, %cst_70 {dimension_numbers = #tpu.dot_dimension_numbers<[1], [0], [0], [1], [0, 0, 1, 1], [], []>} : vector<2x448xf32>, vector<448x128xf32>, vector<2x128xf32> -> vector<2x128xf32>
    %246 = vector.extract_strided_slice %2 {offsets = [4, 0], sizes = [1, 128], strides = [1, 1]} : vector<7x192xf32> to vector<1x128xf32>
    %247 = vector.broadcast %246 : vector<1x128xf32> to vector<2x128xf32>
    %248 = arith.addf %245, %247 : vector<2x128xf32>
    %cst_71 = arith.constant 5.000000e-01 : f32
    %249 = vector.broadcast %cst_71 : f32 to vector<2x128xf32>
    %250 = arith.mulf %249, %248 : vector<2x128xf32>
    %cst_72 = arith.constant 0.707106769 : f32
    %251 = vector.broadcast %cst_72 : f32 to vector<2x128xf32>
    %252 = arith.mulf %248, %251 : vector<2x128xf32>
    %253 = math.erf %252 : vector<2x128xf32>
    %cst_73 = arith.constant 1.000000e+00 : f32
    %254 = vector.broadcast %cst_73 : f32 to vector<2x128xf32>
    %255 = arith.addf %254, %253 : vector<2x128xf32>
    %256 = arith.mulf %250, %255 : vector<2x128xf32>
    %c0_74 = arith.constant 0 : index
    %c0_75 = arith.constant 0 : index
    %257 = vector.load %arg5[%c0_74, %c0_75] : memref<128x32xf32, #tpu.memory_space<vmem>>, vector<128x32xf32>
    %cst_76 = arith.constant dense<0.000000e+00> : vector<2x32xf32>
    %258 = tpu.matmul %256, %257, %cst_76 {dimension_numbers = #tpu.dot_dimension_numbers<[1], [0], [0], [1], [0, 0, 1, 1], [], []>} : vector<2x128xf32>, vector<128x32xf32>, vector<2x32xf32> -> vector<2x32xf32>
    %259 = vector.extract_strided_slice %2 {offsets = [5, 0], sizes = [1, 32], strides = [1, 1]} : vector<7x192xf32> to vector<1x32xf32>
    %260 = vector.broadcast %259 : vector<1x32xf32> to vector<2x32xf32>
    %261 = arith.addf %258, %260 : vector<2x32xf32>
    %cst_77 = arith.constant 5.000000e-01 : f32
    %262 = vector.broadcast %cst_77 : f32 to vector<2x32xf32>
    %263 = arith.mulf %262, %261 : vector<2x32xf32>
    %cst_78 = arith.constant 0.707106769 : f32
    %264 = vector.broadcast %cst_78 : f32 to vector<2x32xf32>
    %265 = arith.mulf %261, %264 : vector<2x32xf32>
    %266 = math.erf %265 : vector<2x32xf32>
    %cst_79 = arith.constant 1.000000e+00 : f32
    %267 = vector.broadcast %cst_79 : f32 to vector<2x32xf32>
    %268 = arith.addf %267, %266 : vector<2x32xf32>
    %269 = arith.mulf %263, %268 : vector<2x32xf32>
    %c0_80 = arith.constant 0 : index
    %c0_81 = arith.constant 0 : index
    %270 = vector.load %arg6[%c0_80, %c0_81] : memref<32x128xf32, #tpu.memory_space<vmem>>, vector<32x128xf32>
    %cst_82 = arith.constant dense<0.000000e+00> : vector<2x128xf32>
    %271 = tpu.matmul %269, %270, %cst_82 {dimension_numbers = #tpu.dot_dimension_numbers<[1], [0], [0], [1], [0, 0, 1, 1], [], []>} : vector<2x32xf32>, vector<32x128xf32>, vector<2x128xf32> -> vector<2x128xf32>
    %272 = vector.extract_strided_slice %2 {offsets = [6, 0], sizes = [1, 128], strides = [1, 1]} : vector<7x192xf32> to vector<1x128xf32>
    %273 = vector.broadcast %272 : vector<1x128xf32> to vector<2x128xf32>
    %274 = arith.addf %271, %273 : vector<2x128xf32>
    %c0_83 = arith.constant 0 : index
    %c0_84 = arith.constant 0 : index
    %275 = vector.load %arg7[%c0_83, %c0_84] : memref<2x128xf32, #tpu.memory_space<vmem>>, vector<2x128xf32>
    tpu.vector_store %arg7[%c0_83, %c0_84], %274 {strides = array<i32>} : memref<2x128xf32, #tpu.memory_space<vmem>>, vector<2x128xf32>,
    %276 = arith.negf %274 : vector<2x128xf32>
    %277 = math.exp %276 : vector<2x128xf32>
    %cst_85 = arith.constant 1.000000e+00 : f32
    %278 = vector.broadcast %cst_85 : f32 to vector<2x128xf32>
    %279 = arith.addf %278, %277 : vector<2x128xf32>
    %280 = arith.divf %278, %279 : vector<2x128xf32>
    %c0_86 = arith.constant 0 : index
    %c0_87 = arith.constant 0 : index
    %281 = vector.load %arg8[%c0_86, %c0_87] : memref<2x128xf32, #tpu.memory_space<vmem>>, vector<2x128xf32>
    tpu.vector_store %arg8[%c0_86, %c0_87], %280 {strides = array<i32>} : memref<2x128xf32, #tpu.memory_space<vmem>>, vector<2x128xf32>,
    return
  }
}

</mosaic_0001>

<llo_original>
// kernel: combined_nn_forward.1
$region0: #{combined_nn_forward.1}
  #allocation0 [shape = 'u32[]', space=smem, size = 0x4, offset = 0x4, fixed_abs, tag = 'smem constant byte address 0x4 - core index']
  #allocation1 [shape = 'u32[144,128]{1,0:T(1,128)}', space=vmem, size = 0x12000, scoped, tag = 'internal scratch']
  %s0 = inlined_call_operand.vmem [shape: f32[16,32], index: 0, kind: input, shape index: {}]
  %s1 = inlined_call_operand.vmem [shape: f32[12,32], index: 1, kind: input, shape index: {}]
  %s2 = inlined_call_operand.vmem [shape: f32[2,32,192], index: 2, kind: input, shape index: {}]
  %s3 = inlined_call_operand.vmem [shape: f32[7,192], index: 3, kind: input, shape index: {}]
  %s4 = inlined_call_operand.hbm [shape: f32[448,128], index: 4, kind: input, shape index: {}]
  %s5 = inlined_call_operand.vmem [shape: f32[128,32], index: 5, kind: input, shape index: {}]
  %s6 = inlined_call_operand.vmem [shape: f32[32,128], index: 6, kind: input, shape index: {}]
  %s7 = inlined_call_operand.hbm [shape: f32[2,128], index: 7, kind: output, shape index: {0}]
  %s8 = inlined_call_operand.hbm [shape: f32[2,128], index: 8, kind: output, shape index: {1}]
  %9 = xla_tuple %s7, %s8
  %s10 = sld [smem:[#allocation0]]
  $region50: #{combined_nn_forward.1} parent=0
    _
  %s12 = ssub.s32 1, %s10
  %s13 = scalar_select 0, %s12, %s10
  $region1: #{combined_nn_forward.1} parent=0
    #allocation2 [shape = 'u8[229376]{0}', space=vmem, size = 0x38000, scoped, tag = 'input window, operand 4, single buffered']
    #allocation3 [shape = 's32[1]{0}', space=sflag, size = 0x4, scoped, tag = 'scoped memory for combined_nn_forward.1']
    #allocation4 [shape = 's32[1]{0}', space=sflag, size = 0x4, scoped, tag = 'scoped memory for combined_nn_forward.1']
    #allocation5 [shape = 'u8[1024]{0}', space=vmem, size = 0x400, scoped, tag = 'output window, operand 0, single buffered']
    #allocation6 [shape = 'u8[1024]{0}', space=vmem, size = 0x400, scoped, tag = 'output window, operand 1, single buffered']
    #allocation7 [shape = 's32[1]{0}', space=sflag, size = 0x4, scoped, tag = 'scoped memory for combined_nn_forward.1']
    %14 = vsyncpa [#allocation3], 0
    %15 = vsyncpa [#allocation4], 0
    %16 = vsyncpa [#allocation7], 0
    // Predicated region
    $region2: #{combined_nn_forward.1} parent=1 // pred_check
      _
    $region3: #{combined_nn_forward.1} parent=1 // pred_check_branch
      %18 = sbr.rel (0) target = $region5
    $region4: #{combined_nn_forward.1} parent=1 // pred_region
      _
    $region5: #{combined_nn_forward.1} parent=1 // pred_fallthru
      _
    // Predicated region
    $region6: #{combined_nn_forward.1} parent=1 // pred_check
      _
    $region7: #{combined_nn_forward.1} parent=1 // pred_check_branch
      %20 = sbr.rel (0) target = $region9
    $region8: #{combined_nn_forward.1} parent=1 // pred_region
      _
    $region9: #{combined_nn_forward.1} parent=1 // pred_fallthru
      _
    // Predicated region
    $region10: #{combined_nn_forward.1} parent=1 // pred_check
      _
    $region11: #{combined_nn_forward.1} parent=1 // pred_check_branch
      %22 = sbr.rel (0) target = $region13
    $region12: #{combined_nn_forward.1} parent=1 // pred_region
      _
    $region13: #{combined_nn_forward.1} parent=1 // pred_fallthru
      _
    // Predicated region
    $region14: #{combined_nn_forward.1} parent=1 // pred_check
      _
    $region15: #{combined_nn_forward.1} parent=1 // pred_check_branch
      %24 = sbr.rel (0) target = $region17
    $region16: #{combined_nn_forward.1} parent=1 // pred_region
      _
    $region17: #{combined_nn_forward.1} parent=1 // pred_fallthru
      _
    // Predicated region
    $region18: #{combined_nn_forward.1} parent=1 // pred_check
      _
    $region19: #{combined_nn_forward.1} parent=1 // pred_check_branch
      %26 = sbr.rel (0) target = $region21
    $region20: #{combined_nn_forward.1} parent=1 // pred_region
      %s28 = ssub.s32 7168, 7168
      %29 = vsyncadd [#allocation3], %s28
      %s30 = sshll.u32 [#allocation2], 4
      %s31 = int_to_ptr.vmem [resolvable:$true] %s30
      %36 = dma.hbm_to_vmem [thread:$0]  %s4, 7168, %s31, [#allocation3], 128, 128, 8
    $region21: #{combined_nn_forward.1} parent=1 // pred_fallthru
      _
    // Predicated region
    $region22: #{combined_nn_forward.1} parent=1 // pred_check
      _
    $region23: #{combined_nn_forward.1} parent=1 // pred_check_branch
      %38 = sbr.rel (0) target = $region25
    $region24: #{combined_nn_forward.1} parent=1 // pred_region
      _
    $region25: #{combined_nn_forward.1} parent=1 // pred_fallthru
      _
    // Predicated region
    $region26: #{combined_nn_forward.1} parent=1 // pred_check
      _
    $region27: #{combined_nn_forward.1} parent=1 // pred_check_branch
      %40 = sbr.rel (0) target = $region29
    $region28: #{combined_nn_forward.1} parent=1 // pred_region
      _
    $region29: #{combined_nn_forward.1} parent=1 // pred_fallthru
      _
    // Predicated region
    $region30: #{combined_nn_forward.1} parent=1 // pred_check
      _
    $region31: #{combined_nn_forward.1} parent=1 // pred_check_branch
      %42 = sbr.rel (0) target = $region33
    $region32: #{combined_nn_forward.1} parent=1 // pred_region
      %43 = dma.done [#allocation3], 7168
    $region33: #{combined_nn_forward.1} parent=1 // pred_fallthru
      _
    %v44 = vld [vmem:[%s0] sm:$0xff]
    %v45 = vld [vmem:[%s0 + $0x8] sm:$0xff]
    %v46 = vld [vmem:[%s1] sm:$0xff]
    %v47 = vld [vmem:[%s1 + $0x8] sm:$0xf]
    %v48 = vld [vmem:[%s3] sm:$0x7f]
    %v49 = vld [vmem:[%s3 + $0x8] sm:$0x7f]
    %v50 = vld [vmem:[%s2] sm:$0xff]
    %v51 = vld [vmem:[%s2 + $0x8] sm:$0xff]
    %v52 = vld [vmem:[%s2 + $0x10] sm:$0xff]
    %v53 = vld [vmem:[%s2 + $0x18] sm:$0xff]
    %v54 = vld [vmem:[%s2 + $0x20] sm:$0xff]
    %v55 = vld [vmem:[%s2 + $0x28] sm:$0xff]
    %v56 = vld [vmem:[%s2 + $0x30] sm:$0xff]
    %v57 = vld [vmem:[%s2 + $0x38] sm:$0xff]
    %v58 = vlaneseq
    %v59 = vshrl.u32 %v58, 7
    %v60 = vsub.s32 0, %v59
    %v61 = vrot.slane %v48, %v60
    %v62 = vlaneseq
    %v63 = vshrl.u32 %v62, 7
    %v64 = vsub.s32 0, %v63
    %v65 = vrot.slane %v49, %v64
    %vm66 = vcmask 261120
    %v68 = vsel %vm66, %v44, 0
    %v71 = vsel %vm66, %v45, 0
    %73 = vmatprep.subr.mxu0 %v51
    %74 = vmatpush1.msra.mxu0 %v50
    %75 = vmatprep.subr.mxu0 %v53
    %76 = vmatpush1.msra.mxu0 %v52
    %77 = vmatprep.subr.mxu0 %v55
    %78 = vmatpush1.msra.mxu0 %v54
    %79 = vmatprep.subr.mxu0 %v57
    %80 = vmatpush1.msra.mxu0 %v56
    %81 = vmatprep.subr.mxu0 0.0
    %82 = vmatpush1.msra.mxu0 0.0
    %83 = vmatprep.subr.mxu0 0.0
    %84 = vmatpush1.msra.mxu0 0.0
    %85 = vmatprep.subr.mxu0 0.0
    %86 = vmatpush1.msra.mxu0 0.0
    %87 = vmatprep.subr.mxu0 0.0
    %88 = vmatpush1.msra.mxu0 0.0
    %89 = vmatprep.subr.mxu0 0.0
    %90 = vmatpush1.msra.mxu0 0.0
    %91 = vmatprep.subr.mxu0 0.0
    %92 = vmatpush1.msra.mxu0 0.0
    %93 = vmatprep.subr.mxu0 0.0
    %94 = vmatpush1.msra.mxu0 0.0
    %95 = vmatprep.subr.mxu0 0.0
    %96 = vmatpush1.msra.mxu0 0.0
    %97 = vmatprep.subr.mxu0 0.0
    %98 = vmatpush1.msra.mxu0 0.0
    %99 = vmatprep.subr.mxu0 0.0
    %100 = vmatpush1.msra.mxu0 0.0
    %101 = vmatprep.subr.mxu0 0.0
    %102 = vmatpush1.msra.mxu0 0.0
    %103 = vmatprep.subr.mxu0 0.0
    %104 = vmatpush1.msra.mxu0 0.0
    %105 = vmatprep.subr.mxu0 0.0
    %106 = vmatpush1.msra.mxu0 0.0
    %107 = vmatprep.subr.mxu0 0.0
    %108 = vmatpush1.msra.mxu0 0.0
    %109 = vmatprep.subr.mxu0 0.0
    %110 = vmatpush1.msra.mxu0 0.0
    %111 = vmatprep.subr.mxu0 0.0
    %112 = vmatpush1.msra.mxu0 0.0
    %113 = vmatprep.subr.mxu0 0.0
    %114 = vmatpush1.msra.mxu0 0.0
    %115 = vmatprep.subr.mxu0 0.0
    %116 = vmatpush1.msra.mxu0 0.0
    %117 = vmatprep.subr.mxu0 0.0
    %118 = vmatpush1.msra.mxu0 0.0
    %119 = vmatprep.subr.mxu0 0.0
    %120 = vmatpush1.msra.mxu0 0.0
    %121 = vmatprep.subr.mxu0 0.0
    %122 = vmatpush1.msra.mxu0 0.0
    %123 = vmatprep.subr.mxu0 0.0
    %124 = vmatpush1.msra.mxu0 0.0
    %125 = vmatprep.subr.mxu0 0.0
    %126 = vmatpush1.msra.mxu0 0.0
    %127 = vmatprep.subr.mxu0 0.0
    %128 = vmatpush1.msra.mxu0 0.0
    %129 = vmatprep.subr.mxu0 0.0
    %130 = vmatpush1.msra.mxu0 0.0
    %131 = vmatprep.subr.mxu0 0.0
    %132 = vmatpush1.msra.mxu0 0.0
    %133 = vmatprep.subr.mxu0 0.0
    %134 = vmatpush1.msra.mxu0 0.0
    %135 = vmatprep.subr.mxu0 0.0
    %136 = vmatpush1.msra.mxu0 0.0
    %137 = vmatprep.mubr.f32.mxu0 0.0
    %138 = vmatmul.mubr.f32.gmra.mrb[0].mxu0 %v68
    %v139 = vpop.f32.mrb[0].mxu0
    %v140 = vadd.f32 %v61, %v139
    %v141 = vpop.f32.mrb[0].mxu0
    %v142 = vadd.f32 %v65, %v141
    %143 = vmatprep.mubr.f32.mxu0 0.0
    %144 = vmatmul.mubr.f32.gmra.mrb[0].mxu0 %v71
    %v145 = vpop.f32.mrb[0].mxu0
    %v146 = vadd.f32 %v61, %v145
    %v147 = vpop.f32.mrb[0].mxu0
    %v148 = vadd.f32 %v65, %v147
    %149 = vdwg.mxu0
    %s150 = scalar_lea.vmem %s2, 64
    %v151 = vld [vmem:[%s150] sm:$0xff]
    %v152 = vld [vmem:[%s150 + $0x8] sm:$0xff]
    %v153 = vld [vmem:[%s150 + $0x10] sm:$0xff]
    %v154 = vld [vmem:[%s150 + $0x18] sm:$0xff]
    %v155 = vld [vmem:[%s150 + $0x20] sm:$0xff]
    %v156 = vld [vmem:[%s150 + $0x28] sm:$0xff]
    %v157 = vld [vmem:[%s150 + $0x30] sm:$0xff]
    %v158 = vld [vmem:[%s150 + $0x38] sm:$0xff]
    %v159 = vlaneseq
    %v160 = vshrl.u32 %v159, 7
    %v161 = vsub.s32 1, %v160
    %v162 = vrot.slane %v48, %v161
    %v163 = vlaneseq
    %v164 = vshrl.u32 %v163, 7
    %v165 = vsub.s32 1, %v164
    %v166 = vrot.slane %v49, %v165
    %v168 = vsel %vm66, %v46, 0
    %v171 = vsel %vm66, %v47, 0
    %173 = vmatprep.subr.mxu0 %v152
    %174 = vmatpush1.msra.mxu0 %v151
    %175 = vmatprep.subr.mxu0 %v154
    %176 = vmatpush1.msra.mxu0 %v153
    %177 = vmatprep.subr.mxu0 %v156
    %178 = vmatpush1.msra.mxu0 %v155
    %179 = vmatprep.subr.mxu0 %v158
    %180 = vmatpush1.msra.mxu0 %v157
    %181 = vmatprep.subr.mxu0 0.0
    %182 = vmatpush1.msra.mxu0 0.0
    %183 = vmatprep.subr.mxu0 0.0
    %184 = vmatpush1.msra.mxu0 0.0
    %185 = vmatprep.subr.mxu0 0.0
    %186 = vmatpush1.msra.mxu0 0.0
    %187 = vmatprep.subr.mxu0 0.0
    %188 = vmatpush1.msra.mxu0 0.0
    %189 = vmatprep.subr.mxu0 0.0
    %190 = vmatpush1.msra.mxu0 0.0
    %191 = vmatprep.subr.mxu0 0.0
    %192 = vmatpush1.msra.mxu0 0.0
    %193 = vmatprep.subr.mxu0 0.0
    %194 = vmatpush1.msra.mxu0 0.0
    %195 = vmatprep.subr.mxu0 0.0
    %196 = vmatpush1.msra.mxu0 0.0
    %197 = vmatprep.subr.mxu0 0.0
    %198 = vmatpush1.msra.mxu0 0.0
    %199 = vmatprep.subr.mxu0 0.0
    %200 = vmatpush1.msra.mxu0 0.0
    %201 = vmatprep.subr.mxu0 0.0
    %202 = vmatpush1.msra.mxu0 0.0
    %203 = vmatprep.subr.mxu0 0.0
    %204 = vmatpush1.msra.mxu0 0.0
    %205 = vmatprep.subr.mxu0 0.0
    %206 = vmatpush1.msra.mxu0 0.0
    %207 = vmatprep.subr.mxu0 0.0
    %208 = vmatpush1.msra.mxu0 0.0
    %209 = vmatprep.subr.mxu0 0.0
    %210 = vmatpush1.msra.mxu0 0.0
    %211 = vmatprep.subr.mxu0 0.0
    %212 = vmatpush1.msra.mxu0 0.0
    %213 = vmatprep.subr.mxu0 0.0
    %214 = vmatpush1.msra.mxu0 0.0
    %215 = vmatprep.subr.mxu0 0.0
    %216 = vmatpush1.msra.mxu0 0.0
    %217 = vmatprep.subr.mxu0 0.0
    %218 = vmatpush1.msra.mxu0 0.0
    %219 = vmatprep.subr.mxu0 0.0
    %220 = vmatpush1.msra.mxu0 0.0
    %221 = vmatprep.subr.mxu0 0.0
    %222 = vmatpush1.msra.mxu0 0.0
    %223 = vmatprep.subr.mxu0 0.0
    %224 = vmatpush1.msra.mxu0 0.0
    %225 = vmatprep.subr.mxu0 0.0
    %226 = vmatpush1.msra.mxu0 0.0
    %227 = vmatprep.subr.mxu0 0.0
    %228 = vmatpush1.msra.mxu0 0.0
    %229 = vmatprep.subr.mxu0 0.0
    %230 = vmatpush1.msra.mxu0 0.0
    %231 = vmatprep.subr.mxu0 0.0
    %232 = vmatpush1.msra.mxu0 0.0
    %233 = vmatprep.subr.mxu0 0.0
    %234 = vmatpush1.msra.mxu0 0.0
    %235 = vmatprep.subr.mxu0 0.0
    %236 = vmatpush1.msra.mxu0 0.0
    %237 = vmatprep.mubr.f32.mxu0 0.0
    %238 = vmatmul.mubr.f32.gmra.mrb[0].mxu0 %v168
    %v239 = vpop.f32.mrb[0].mxu0
    %v240 = vadd.f32 %v162, %v239
    %v241 = vpop.f32.mrb[0].mxu0
    %v242 = vadd.f32 %v166, %v241
    %243 = vmatprep.mubr.f32.mxu0 0.0
    %244 = vmatmul.mubr.f32.gmra.mrb[0].mxu0 %v171
    %v245 = vpop.f32.mrb[0].mxu0
    %v246 = vadd.f32 %v162, %v245
    %v247 = vpop.f32.mrb[0].mxu0
    %v248 = vadd.f32 %v166, %v247
    %249 = vdwg.mxu0
    %v250 = vlaneseq
    %v251 = vshrl.u32 %v250, 7
    %v252 = vadd.s32 %v251, 8
    %vm253 = vcmp.lt.s32.totalorder %v251, 0
    %v254 = vsub.s32 0, %v251
    %v255 = vsel %vm253, %v254, %v251
    %v256 = vshrl.u32 %v255, 1
    %v257 = vand.u32 %v255, 1
    %v258 = vsub.s32 0, %v257
    %v259 = vsel %vm253, %v258, %v257
    %vm260 = vcmp.lt.s32.totalorder %v252, 0
    %v261 = vsub.s32 0, %v252
    %v262 = vsel %vm260, %v261, %v252
    %v263 = vshrl.u32 %v262, 1
    %v264 = vand.u32 %v262, 1
    %v265 = vsub.s32 0, %v264
    %v266 = vsel %vm260, %v265, %v264
    %vm267 = vcmp.ne.s32.totalorder %v259, 0
    %vm268 = vcmp.ne.s32.totalorder %v266, 0
    %vm269 = vcmp.lt.s32.totalorder %v259, 0
    %vm270 = vcmp.lt.s32.totalorder %v266, 0
    %vm271 = vmand %vm269, %vm267
    %vm272 = vmand %vm270, %vm268
    %v273 = vadd.s32 %v259, 2
    %v274 = vadd.s32 %v266, 2
    %v275 = vsel %vm271, %v273, %v259
    %v276 = vsel %vm272, %v274, %v266
    %v277 = vlaneseq
    %v278 = vand.u32 %v277, 127
    %vm279 = vcmp.lt.s32.totalorder %v278, 0
    %v280 = vsub.s32 0, %v278
    %v281 = vsel %vm279, %v280, %v278
    %v282 = vshrl.u32 %v281, 1
    %v283 = vand.u32 %v281, 1
    %v284 = vsub.s32 0, %v283
    %v285 = vsel %vm279, %v284, %v283
    %vm286 = vcmp.ne.s32.totalorder %v285, 0
    %vm287 = vcmp.lt.s32.totalorder %v285, 0
    %vm288 = vmand %vm287, %vm286
    %v289 = vadd.s32 %v285, 2
    %v290 = vsel %vm288, %v289, %v285
    %vm291 = vcmp.eq.s32.totalorder %v275, %v290
    %vm292 = vcmp.eq.s32.totalorder %v276, %v290
    %v293 = vsel %vm291, 0.0, -1e+30
    %v294 = vsel %vm292, 0.0, -1e+30
    %297 = vrot.lane.b32.xlu0 %v240, 96
    %v298 = vpop.permute.xlu0 %297
    %299 = vrot.lane.b32.xlu0 %v246, 96
    %v300 = vpop.permute.xlu0 %299
    %vm301 = vcmask 64512
    %v303 = vsel %vm301, %v140, 0
    %v306 = vsel %vm301, %v146, 0
    %v308 = vsel %vm301, %v298, 0
    %v310 = vsel %vm301, %v300, 0
    %312 = vmatprep.subr.mxu0 0.0
    %313 = vmatpush1.xpose.msra.mxu0 %v308
    %314 = vmatprep.subr.mxu0 0.0
    %315 = vmatpush1.xpose.msra.mxu0 %v310
    %316 = vmatprep.subr.mxu0 0.0
    %317 = vmatpush1.xpose.msra.mxu0 0.0
    %318 = vmatprep.subr.mxu0 0.0
    %319 = vmatpush1.xpose.msra.mxu0 0.0
    %320 = vmatprep.subr.mxu0 0.0
    %321 = vmatpush1.xpose.msra.mxu0 0.0
    %322 = vmatprep.subr.mxu0 0.0
    %323 = vmatpush1.xpose.msra.mxu0 0.0
    %324 = vmatprep.subr.mxu0 0.0
    %325 = vmatpush1.xpose.msra.mxu0 0.0
    %326 = vmatprep.subr.mxu0 0.0
    %327 = vmatpush1.xpose.msra.mxu0 0.0
    %328 = vmatprep.subr.mxu0 0.0
    %329 = vmatpush1.xpose.msra.mxu0 0.0
    %330 = vmatprep.subr.mxu0 0.0
    %331 = vmatpush1.xpose.msra.mxu0 0.0
    %332 = vmatprep.subr.mxu0 0.0
    %333 = vmatpush1.xpose.msra.mxu0 0.0
    %334 = vmatprep.subr.mxu0 0.0
    %335 = vmatpush1.xpose.msra.mxu0 0.0
    %336 = vmatprep.subr.mxu0 0.0
    %337 = vmatpush1.xpose.msra.mxu0 0.0
    %338 = vmatprep.subr.mxu0 0.0
    %339 = vmatpush1.xpose.msra.mxu0 0.0
    %340 = vmatprep.subr.mxu0 0.0
    %341 = vmatpush1.xpose.msra.mxu0 0.0
    %342 = vmatprep.subr.mxu0 0.0
    %343 = vmatpush1.xpose.msra.mxu0 0.0
    %344 = vmatprep.subr.mxu0 0.0
    %345 = vmatpush1.xpose.msra.mxu0 0.0
    %346 = vmatprep.subr.mxu0 0.0
    %347 = vmatpush1.xpose.msra.mxu0 0.0
    %348 = vmatprep.subr.mxu0 0.0
    %349 = vmatpush1.xpose.msra.mxu0 0.0
    %350 = vmatprep.subr.mxu0 0.0
    %351 = vmatpush1.xpose.msra.mxu0 0.0
    %352 = vmatprep.subr.mxu0 0.0
    %353 = vmatpush1.xpose.msra.mxu0 0.0
    %354 = vmatprep.subr.mxu0 0.0
    %355 = vmatpush1.xpose.msra.mxu0 0.0
    %356 = vmatprep.subr.mxu0 0.0
    %357 = vmatpush1.xpose.msra.mxu0 0.0
    %358 = vmatprep.subr.mxu0 0.0
    %359 = vmatpush1.xpose.msra.mxu0 0.0
    %360 = vmatprep.subr.mxu0 0.0
    %361 = vmatpush1.xpose.msra.mxu0 0.0
    %362 = vmatprep.subr.mxu0 0.0
    %363 = vmatpush1.xpose.msra.mxu0 0.0
    %364 = vmatprep.subr.mxu0 0.0
    %365 = vmatpush1.xpose.msra.mxu0 0.0
    %366 = vmatprep.subr.mxu0 0.0
    %367 = vmatpush1.xpose.msra.mxu0 0.0
    %368 = vmatprep.subr.mxu0 0.0
    %369 = vmatpush1.xpose.msra.mxu0 0.0
    %370 = vmatprep.subr.mxu0 0.0
    %371 = vmatpush1.xpose.msra.mxu0 0.0
    %372 = vmatprep.subr.mxu0 0.0
    %373 = vmatpush1.xpose.msra.mxu0 0.0
    %374 = vmatprep.subr.mxu0 0.0
    %375 = vmatpush1.xpose.msra.mxu0 0.0
    %376 = vmatprep.mubr.f32.mxu0 0.0
    %377 = vmatmul.mubr.f32.gmra.mrb[0].mxu0 %v303
    %v378 = vpop.f32.mrb[0].mxu0
    %v379 = vadd.f32 %v293, %v378
    %v380 = vpop.f32.mrb[0].mxu0
    %381 = vmatprep.mubr.f32.mxu0 0.0
    %382 = vmatmul.mubr.f32.gmra.mrb[0].mxu0 %v306
    %v383 = vpop.f32.mrb[0].mxu0
    %v384 = vadd.f32 %v294, %v383
    %v385 = vpop.f32.mrb[0].mxu0
    %386 = vdwg.mxu0
    %vm387 = vcmask 97280
    %v388 = vsel %vm387, %v379, -inf
    %389 = vmax.xlane.f32.xlu0 %v388
    %v390 = vpop.xlane.xlu0 %389
    %v391 = vsel %vm387, %v384, -inf
    %392 = vmax.xlane.f32.xlu0 %v391
    %v393 = vpop.xlane.xlu0 %392
    %v394 = vsub.f32 %v379, %v390
    %v395 = vsub.f32 %v384, %v393
    %v396 = vmul.f32 %v394, 1.442695
    %v397 = vpow.pop %v396
    %v398 = vmul.f32 %v395, 1.442695
    %v399 = vpow.pop %v398
    %v400 = vsel %vm387, %v397, 0.0
    %401 = vadd.xlane.f32.xlu0 %v400
    %v402 = vpop.xlane.xlu0 %401
    %v403 = vsel %vm387, %v399, 0.0
    %404 = vadd.xlane.f32.xlu0 %v403
    %v405 = vpop.xlane.xlu0 %404
    %v406 = vrcp.pop %v402
    %v407 = vmul.f32 %v397, %v406
    %v408 = vrcp.pop %v405
    %v409 = vmul.f32 %v399, %v408
    %410 = vrot.lane.b32.xlu0 %v140, 120
    %v411 = vpop.permute.xlu0 %410
    %412 = vrot.lane.b32.xlu0 %v146, 120
    %v413 = vpop.permute.xlu0 %412
    %414 = vrot.lane.b32.xlu0 %v240, 88
    %v415 = vpop.permute.xlu0 %414
    %416 = vrot.lane.b32.xlu0 %v246, 88
    %v417 = vpop.permute.xlu0 %416
    %v418 = vsel %vm301, %v411, 0
    %v420 = vsel %vm301, %v413, 0
    %v422 = vsel %vm301, %v415, 0
    %v424 = vsel %vm301, %v417, 0
    %426 = vmatprep.subr.mxu0 0.0
    %427 = vmatpush1.xpose.msra.mxu0 %v422
    %428 = vmatprep.subr.mxu0 0.0
    %429 = vmatpush1.xpose.msra.mxu0 %v424
    %430 = vmatprep.subr.mxu0 0.0
    %431 = vmatpush1.xpose.msra.mxu0 0.0
    %432 = vmatprep.subr.mxu0 0.0
    %433 = vmatpush1.xpose.msra.mxu0 0.0
    %434 = vmatprep.subr.mxu0 0.0
    %435 = vmatpush1.xpose.msra.mxu0 0.0
    %436 = vmatprep.subr.mxu0 0.0
    %437 = vmatpush1.xpose.msra.mxu0 0.0
    %438 = vmatprep.subr.mxu0 0.0
    %439 = vmatpush1.xpose.msra.mxu0 0.0
    %440 = vmatprep.subr.mxu0 0.0
    %441 = vmatpush1.xpose.msra.mxu0 0.0
    %442 = vmatprep.subr.mxu0 0.0
    %443 = vmatpush1.xpose.msra.mxu0 0.0
    %444 = vmatprep.subr.mxu0 0.0
    %445 = vmatpush1.xpose.msra.mxu0 0.0
    %446 = vmatprep.subr.mxu0 0.0
    %447 = vmatpush1.xpose.msra.mxu0 0.0
    %448 = vmatprep.subr.mxu0 0.0
    %449 = vmatpush1.xpose.msra.mxu0 0.0
    %450 = vmatprep.subr.mxu0 0.0
    %451 = vmatpush1.xpose.msra.mxu0 0.0
    %452 = vmatprep.subr.mxu0 0.0
    %453 = vmatpush1.xpose.msra.mxu0 0.0
    %454 = vmatprep.subr.mxu0 0.0
    %455 = vmatpush1.xpose.msra.mxu0 0.0
    %456 = vmatprep.subr.mxu0 0.0
    %457 = vmatpush1.xpose.msra.mxu0 0.0
    %458 = vmatprep.subr.mxu0 0.0
    %459 = vmatpush1.xpose.msra.mxu0 0.0
    %460 = vmatprep.subr.mxu0 0.0
    %461 = vmatpush1.xpose.msra.mxu0 0.0
    %462 = vmatprep.subr.mxu0 0.0
    %463 = vmatpush1.xpose.msra.mxu0 0.0
    %464 = vmatprep.subr.mxu0 0.0
    %465 = vmatpush1.xpose.msra.mxu0 0.0
    %466 = vmatprep.subr.mxu0 0.0
    %467 = vmatpush1.xpose.msra.mxu0 0.0
    %468 = vmatprep.subr.mxu0 0.0
    %469 = vmatpush1.xpose.msra.mxu0 0.0
    %470 = vmatprep.subr.mxu0 0.0
    %471 = vmatpush1.xpose.msra.mxu0 0.0
    %472 = vmatprep.subr.mxu0 0.0
    %473 = vmatpush1.xpose.msra.mxu0 0.0
    %474 = vmatprep.subr.mxu0 0.0
    %475 = vmatpush1.xpose.msra.mxu0 0.0
    %476 = vmatprep.subr.mxu0 0.0
    %477 = vmatpush1.xpose.msra.mxu0 0.0
    %478 = vmatprep.subr.mxu0 0.0
    %479 = vmatpush1.xpose.msra.mxu0 0.0
    %480 = vmatprep.subr.mxu0 0.0
    %481 = vmatpush1.xpose.msra.mxu0 0.0
    %482 = vmatprep.subr.mxu0 0.0
    %483 = vmatpush1.xpose.msra.mxu0 0.0
    %484 = vmatprep.subr.mxu0 0.0
    %485 = vmatpush1.xpose.msra.mxu0 0.0
    %486 = vmatprep.subr.mxu0 0.0
    %487 = vmatpush1.xpose.msra.mxu0 0.0
    %488 = vmatprep.subr.mxu0 0.0
    %489 = vmatpush1.xpose.msra.mxu0 0.0
    %490 = vmatprep.mubr.f32.mxu0 0.0
    %491 = vmatmul.mubr.f32.gmra.mrb[0].mxu0 %v418
    %v492 = vpop.f32.mrb[0].mxu0
    %v493 = vadd.f32 %v293, %v492
    %v494 = vpop.f32.mrb[0].mxu0
    %495 = vmatprep.mubr.f32.mxu0 0.0
    %496 = vmatmul.mubr.f32.gmra.mrb[0].mxu0 %v420
    %v497 = vpop.f32.mrb[0].mxu0
    %v498 = vadd.f32 %v294, %v497
    %v499 = vpop.f32.mrb[0].mxu0
    %500 = vdwg.mxu0
    %v501 = vsel %vm387, %v493, -inf
    %502 = vmax.xlane.f32.xlu0 %v501
    %v503 = vpop.xlane.xlu0 %502
    %v504 = vsel %vm387, %v498, -inf
    %505 = vmax.xlane.f32.xlu0 %v504
    %v506 = vpop.xlane.xlu0 %505
    %v507 = vsub.f32 %v493, %v503
    %v508 = vsub.f32 %v498, %v506
    %v509 = vmul.f32 %v507, 1.442695
    %v510 = vpow.pop %v509
    %v511 = vmul.f32 %v508, 1.442695
    %v512 = vpow.pop %v511
    %v513 = vsel %vm387, %v510, 0.0
    %514 = vadd.xlane.f32.xlu0 %v513
    %v515 = vpop.xlane.xlu0 %514
    %v516 = vsel %vm387, %v512, 0.0
    %517 = vadd.xlane.f32.xlu0 %v516
    %v518 = vpop.xlane.xlu0 %517
    %v519 = vrcp.pop %v515
    %v520 = vmul.f32 %v510, %v519
    %v521 = vrcp.pop %v518
    %v522 = vmul.f32 %v512, %v521
    %523 = vrot.lane.b32.xlu0 %v240, 32
    %v524 = vpop.permute.xlu0 %523
    %525 = vrot.lane.b32.xlu0 %v246, 32
    %v526 = vpop.permute.xlu0 %525
    %v529 = vsel %vm387, %v520, 0
    %v532 = vsel %vm387, %v522, 0
    %vm534 = vcmask 1043456
    %v535 = vsel %vm534, %v526, 0
    %537 = vmatprep.subr.mxu0 0.0
    %538 = vmatpush1.msra.mxu0 %v524
    %539 = vmatprep.subr.mxu0 0.0
    %540 = vmatpush1.msra.mxu0 %v535
    %541 = vmatprep.subr.mxu0 0.0
    %542 = vmatpush1.msra.mxu0 0.0
    %543 = vmatprep.subr.mxu0 0.0
    %544 = vmatpush1.msra.mxu0 0.0
    %545 = vmatprep.subr.mxu0 0.0
    %546 = vmatpush1.msra.mxu0 0.0
    %547 = vmatprep.subr.mxu0 0.0
    %548 = vmatpush1.msra.mxu0 0.0
    %549 = vmatprep.subr.mxu0 0.0
    %550 = vmatpush1.msra.mxu0 0.0
    %551 = vmatprep.subr.mxu0 0.0
    %552 = vmatpush1.msra.mxu0 0.0
    %553 = vmatprep.subr.mxu0 0.0
    %554 = vmatpush1.msra.mxu0 0.0
    %555 = vmatprep.subr.mxu0 0.0
    %556 = vmatpush1.msra.mxu0 0.0
    %557 = vmatprep.subr.mxu0 0.0
    %558 = vmatpush1.msra.mxu0 0.0
    %559 = vmatprep.subr.mxu0 0.0
    %560 = vmatpush1.msra.mxu0 0.0
    %561 = vmatprep.subr.mxu0 0.0
    %562 = vmatpush1.msra.mxu0 0.0
    %563 = vmatprep.subr.mxu0 0.0
    %564 = vmatpush1.msra.mxu0 0.0
    %565 = vmatprep.subr.mxu0 0.0
    %566 = vmatpush1.msra.mxu0 0.0
    %567 = vmatprep.subr.mxu0 0.0
    %568 = vmatpush1.msra.mxu0 0.0
    %569 = vmatprep.subr.mxu0 0.0
    %570 = vmatpush1.msra.mxu0 0.0
    %571 = vmatprep.subr.mxu0 0.0
    %572 = vmatpush1.msra.mxu0 0.0
    %573 = vmatprep.subr.mxu0 0.0
    %574 = vmatpush1.msra.mxu0 0.0
    %575 = vmatprep.subr.mxu0 0.0
    %576 = vmatpush1.msra.mxu0 0.0
    %577 = vmatprep.subr.mxu0 0.0
    %578 = vmatpush1.msra.mxu0 0.0
    %579 = vmatprep.subr.mxu0 0.0
    %580 = vmatpush1.msra.mxu0 0.0
    %581 = vmatprep.subr.mxu0 0.0
    %582 = vmatpush1.msra.mxu0 0.0
    %583 = vmatprep.subr.mxu0 0.0
    %584 = vmatpush1.msra.mxu0 0.0
    %585 = vmatprep.subr.mxu0 0.0
    %586 = vmatpush1.msra.mxu0 0.0
    %587 = vmatprep.subr.mxu0 0.0
    %588 = vmatpush1.msra.mxu0 0.0
    %589 = vmatprep.subr.mxu0 0.0
    %590 = vmatpush1.msra.mxu0 0.0
    %591 = vmatprep.subr.mxu0 0.0
    %592 = vmatpush1.msra.mxu0 0.0
    %593 = vmatprep.subr.mxu0 0.0
    %594 = vmatpush1.msra.mxu0 0.0
    %595 = vmatprep.subr.mxu0 0.0
    %596 = vmatpush1.msra.mxu0 0.0
    %597 = vmatprep.subr.mxu0 0.0
    %598 = vmatpush1.msra.mxu0 0.0
    %599 = vmatprep.subr.mxu0 0.0
    %600 = vmatpush1.msra.mxu0 0.0
    %601 = vmatprep.mubr.f32.mxu0 0.0
    %602 = vmatmul.mubr.f32.gmra.mrb[0].mxu0 %v529
    %v603 = vpop.f32.mrb[0].mxu0
    %v604 = vadd.f32 0.0, %v603
    %v605 = vpop.f32.mrb[0].mxu0
    %606 = vmatprep.mubr.f32.mxu0 0.0
    %607 = vmatmul.mubr.f32.gmra.mrb[0].mxu0 %v532
    %v608 = vpop.f32.mrb[0].mxu0
    %v609 = vadd.f32 0.0, %v608
    %v610 = vpop.f32.mrb[0].mxu0
    %611 = vdwg.mxu0
    %612 = vrot.lane.b32.xlu0 %v240, 64
    %v613 = vpop.permute.xlu0 %612
    %614 = vrot.lane.b32.xlu0 %v246, 64
    %v615 = vpop.permute.xlu0 %614
    %v618 = vsel %vm387, %v407, 0
    %v621 = vsel %vm387, %v409, 0
    %v623 = vsel %vm534, %v615, 0
    %625 = vmatprep.subr.mxu0 0.0
    %626 = vmatpush1.msra.mxu0 %v613
    %627 = vmatprep.subr.mxu0 0.0
    %628 = vmatpush1.msra.mxu0 %v623
    %629 = vmatprep.subr.mxu0 0.0
    %630 = vmatpush1.msra.mxu0 0.0
    %631 = vmatprep.subr.mxu0 0.0
    %632 = vmatpush1.msra.mxu0 0.0
    %633 = vmatprep.subr.mxu0 0.0
    %634 = vmatpush1.msra.mxu0 0.0
    %635 = vmatprep.subr.mxu0 0.0
    %636 = vmatpush1.msra.mxu0 0.0
    %637 = vmatprep.subr.mxu0 0.0
    %638 = vmatpush1.msra.mxu0 0.0
    %639 = vmatprep.subr.mxu0 0.0
    %640 = vmatpush1.msra.mxu0 0.0
    %641 = vmatprep.subr.mxu0 0.0
    %642 = vmatpush1.msra.mxu0 0.0
    %643 = vmatprep.subr.mxu0 0.0
    %644 = vmatpush1.msra.mxu0 0.0
    %645 = vmatprep.subr.mxu0 0.0
    %646 = vmatpush1.msra.mxu0 0.0
    %647 = vmatprep.subr.mxu0 0.0
    %648 = vmatpush1.msra.mxu0 0.0
    %649 = vmatprep.subr.mxu0 0.0
    %650 = vmatpush1.msra.mxu0 0.0
    %651 = vmatprep.subr.mxu0 0.0
    %652 = vmatpush1.msra.mxu0 0.0
    %653 = vmatprep.subr.mxu0 0.0
    %654 = vmatpush1.msra.mxu0 0.0
    %655 = vmatprep.subr.mxu0 0.0
    %656 = vmatpush1.msra.mxu0 0.0
    %657 = vmatprep.subr.mxu0 0.0
    %658 = vmatpush1.msra.mxu0 0.0
    %659 = vmatprep.subr.mxu0 0.0
    %660 = vmatpush1.msra.mxu0 0.0
    %661 = vmatprep.subr.mxu0 0.0
    %662 = vmatpush1.msra.mxu0 0.0
    %663 = vmatprep.subr.mxu0 0.0
    %664 = vmatpush1.msra.mxu0 0.0
    %665 = vmatprep.subr.mxu0 0.0
    %666 = vmatpush1.msra.mxu0 0.0
    %667 = vmatprep.subr.mxu0 0.0
    %668 = vmatpush1.msra.mxu0 0.0
    %669 = vmatprep.subr.mxu0 0.0
    %670 = vmatpush1.msra.mxu0 0.0
    %671 = vmatprep.subr.mxu0 0.0
    %672 = vmatpush1.msra.mxu0 0.0
    %673 = vmatprep.subr.mxu0 0.0
    %674 = vmatpush1.msra.mxu0 0.0
    %675 = vmatprep.subr.mxu0 0.0
    %676 = vmatpush1.msra.mxu0 0.0
    %677 = vmatprep.subr.mxu0 0.0
    %678 = vmatpush1.msra.mxu0 0.0
    %679 = vmatprep.subr.mxu0 0.0
    %680 = vmatpush1.msra.mxu0 0.0
    %681 = vmatprep.subr.mxu0 0.0
    %682 = vmatpush1.msra.mxu0 0.0
    %683 = vmatprep.subr.mxu0 0.0
    %684 = vmatpush1.msra.mxu0 0.0
    %685 = vmatprep.subr.mxu0 0.0
    %686 = vmatpush1.msra.mxu0 0.0
    %687 = vmatprep.subr.mxu0 0.0
    %688 = vmatpush1.msra.mxu0 0.0
    %689 = vmatprep.mubr.f32.mxu0 0.0
    %690 = vmatmul.mubr.f32.gmra.mrb[0].mxu0 %v618
    %v691 = vpop.f32.mrb[0].mxu0
    %v692 = vadd.f32 %v604, %v691
    %v693 = vpop.f32.mrb[0].mxu0
    %694 = vmatprep.mubr.f32.mxu0 0.0
    %695 = vmatmul.mubr.f32.gmra.mrb[0].mxu0 %v621
    %v696 = vpop.f32.mrb[0].mxu0
    %v697 = vadd.f32 %v609, %v696
    %v698 = vpop.f32.mrb[0].mxu0
    %699 = vdwg.mxu0
    %700 = vrot.lane.b32.xlu0 %v140, 112
    %v701 = vpop.permute.xlu0 %700
    %702 = vrot.lane.b32.xlu0 %v146, 112
    %v703 = vpop.permute.xlu0 %702
    %704 = vrot.lane.b32.xlu0 %v240, 80
    %v705 = vpop.permute.xlu0 %704
    %706 = vrot.lane.b32.xlu0 %v246, 80
    %v707 = vpop.permute.xlu0 %706
    %v708 = vsel %vm301, %v701, 0
    %v710 = vsel %vm301, %v703, 0
    %v712 = vsel %vm301, %v705, 0
    %v714 = vsel %vm301, %v707, 0
    %716 = vmatprep.subr.mxu0 0.0
    %717 = vmatpush1.xpose.msra.mxu0 %v712
    %718 = vmatprep.subr.mxu0 0.0
    %719 = vmatpush1.xpose.msra.mxu0 %v714
    %720 = vmatprep.subr.mxu0 0.0
    %721 = vmatpush1.xpose.msra.mxu0 0.0
    %722 = vmatprep.subr.mxu0 0.0
    %723 = vmatpush1.xpose.msra.mxu0 0.0
    %724 = vmatprep.subr.mxu0 0.0
    %725 = vmatpush1.xpose.msra.mxu0 0.0
    %726 = vmatprep.subr.mxu0 0.0
    %727 = vmatpush1.xpose.msra.mxu0 0.0
    %728 = vmatprep.subr.mxu0 0.0
    %729 = vmatpush1.xpose.msra.mxu0 0.0
    %730 = vmatprep.subr.mxu0 0.0
    %731 = vmatpush1.xpose.msra.mxu0 0.0
    %732 = vmatprep.subr.mxu0 0.0
    %733 = vmatpush1.xpose.msra.mxu0 0.0
    %734 = vmatprep.subr.mxu0 0.0
    %735 = vmatpush1.xpose.msra.mxu0 0.0
    %736 = vmatprep.subr.mxu0 0.0
    %737 = vmatpush1.xpose.msra.mxu0 0.0
    %738 = vmatprep.subr.mxu0 0.0
    %739 = vmatpush1.xpose.msra.mxu0 0.0
    %740 = vmatprep.subr.mxu0 0.0
    %741 = vmatpush1.xpose.msra.mxu0 0.0
    %742 = vmatprep.subr.mxu0 0.0
    %743 = vmatpush1.xpose.msra.mxu0 0.0
    %744 = vmatprep.subr.mxu0 0.0
    %745 = vmatpush1.xpose.msra.mxu0 0.0
    %746 = vmatprep.subr.mxu0 0.0
    %747 = vmatpush1.xpose.msra.mxu0 0.0
    %748 = vmatprep.subr.mxu0 0.0
    %749 = vmatpush1.xpose.msra.mxu0 0.0
    %750 = vmatprep.subr.mxu0 0.0
    %751 = vmatpush1.xpose.msra.mxu0 0.0
    %752 = vmatprep.subr.mxu0 0.0
    %753 = vmatpush1.xpose.msra.mxu0 0.0
    %754 = vmatprep.subr.mxu0 0.0
    %755 = vmatpush1.xpose.msra.mxu0 0.0
    %756 = vmatprep.subr.mxu0 0.0
    %757 = vmatpush1.xpose.msra.mxu0 0.0
    %758 = vmatprep.subr.mxu0 0.0
    %759 = vmatpush1.xpose.msra.mxu0 0.0
    %760 = vmatprep.subr.mxu0 0.0
    %761 = vmatpush1.xpose.msra.mxu0 0.0
    %762 = vmatprep.subr.mxu0 0.0
    %763 = vmatpush1.xpose.msra.mxu0 0.0
    %764 = vmatprep.subr.mxu0 0.0
    %765 = vmatpush1.xpose.msra.mxu0 0.0
    %766 = vmatprep.subr.mxu0 0.0
    %767 = vmatpush1.xpose.msra.mxu0 0.0
    %768 = vmatprep.subr.mxu0 0.0
    %769 = vmatpush1.xpose.msra.mxu0 0.0
    %770 = vmatprep.subr.mxu0 0.0
    %771 = vmatpush1.xpose.msra.mxu0 0.0
    %772 = vmatprep.subr.mxu0 0.0
    %773 = vmatpush1.xpose.msra.mxu0 0.0
    %774 = vmatprep.subr.mxu0 0.0
    %775 = vmatpush1.xpose.msra.mxu0 0.0
    %776 = vmatprep.subr.mxu0 0.0
    %777 = vmatpush1.xpose.msra.mxu0 0.0
    %778 = vmatprep.subr.mxu0 0.0
    %779 = vmatpush1.xpose.msra.mxu0 0.0
    %780 = vmatprep.mubr.f32.mxu0 0.0
    %781 = vmatmul.mubr.f32.gmra.mrb[0].mxu0 %v708
    %v782 = vpop.f32.mrb[0].mxu0
    %v783 = vadd.f32 %v293, %v782
    %v784 = vpop.f32.mrb[0].mxu0
    %785 = vmatprep.mubr.f32.mxu0 0.0
    %786 = vmatmul.mubr.f32.gmra.mrb[0].mxu0 %v710
    %v787 = vpop.f32.mrb[0].mxu0
    %v788 = vadd.f32 %v294, %v787
    %v789 = vpop.f32.mrb[0].mxu0
    %790 = vdwg.mxu0
    %v791 = vsel %vm387, %v783, -inf
    %792 = vmax.xlane.f32.xlu0 %v791
    %v793 = vpop.xlane.xlu0 %792
    %v794 = vsel %vm387, %v788, -inf
    %795 = vmax.xlane.f32.xlu0 %v794
    %v796 = vpop.xlane.xlu0 %795
    %v797 = vsub.f32 %v783, %v793
    %v798 = vsub.f32 %v788, %v796
    %v799 = vmul.f32 %v797, 1.442695
    %v800 = vpow.pop %v799
    %v801 = vmul.f32 %v798, 1.442695
    %v802 = vpow.pop %v801
    %v803 = vsel %vm387, %v800, 0.0
    %804 = vadd.xlane.f32.xlu0 %v803
    %v805 = vpop.xlane.xlu0 %804
    %v806 = vsel %vm387, %v802, 0.0
    %807 = vadd.xlane.f32.xlu0 %v806
    %v808 = vpop.xlane.xlu0 %807
    %v809 = vrcp.pop %v805
    %v810 = vmul.f32 %v800, %v809
    %v811 = vrcp.pop %v808
    %v812 = vmul.f32 %v802, %v811
    %v814 = vsel %vm387, %v810, 0
    %v817 = vsel %vm387, %v812, 0
    %v820 = vsel %vm534, %v248, 0
    %822 = vmatprep.subr.mxu0 0.0
    %823 = vmatpush1.msra.mxu0 %v242
    %824 = vmatprep.subr.mxu0 0.0
    %825 = vmatpush1.msra.mxu0 %v820
    %826 = vmatprep.subr.mxu0 0.0
    %827 = vmatpush1.msra.mxu0 0.0
    %828 = vmatprep.subr.mxu0 0.0
    %829 = vmatpush1.msra.mxu0 0.0
    %830 = vmatprep.subr.mxu0 0.0
    %831 = vmatpush1.msra.mxu0 0.0
    %832 = vmatprep.subr.mxu0 0.0
    %833 = vmatpush1.msra.mxu0 0.0
    %834 = vmatprep.subr.mxu0 0.0
    %835 = vmatpush1.msra.mxu0 0.0
    %836 = vmatprep.subr.mxu0 0.0
    %837 = vmatpush1.msra.mxu0 0.0
    %838 = vmatprep.subr.mxu0 0.0
    %839 = vmatpush1.msra.mxu0 0.0
    %840 = vmatprep.subr.mxu0 0.0
    %841 = vmatpush1.msra.mxu0 0.0
    %842 = vmatprep.subr.mxu0 0.0
    %843 = vmatpush1.msra.mxu0 0.0
    %844 = vmatprep.subr.mxu0 0.0
    %845 = vmatpush1.msra.mxu0 0.0
    %846 = vmatprep.subr.mxu0 0.0
    %847 = vmatpush1.msra.mxu0 0.0
    %848 = vmatprep.subr.mxu0 0.0
    %849 = vmatpush1.msra.mxu0 0.0
    %850 = vmatprep.subr.mxu0 0.0
    %851 = vmatpush1.msra.mxu0 0.0
    %852 = vmatprep.subr.mxu0 0.0
    %853 = vmatpush1.msra.mxu0 0.0
    %854 = vmatprep.subr.mxu0 0.0
    %855 = vmatpush1.msra.mxu0 0.0
    %856 = vmatprep.subr.mxu0 0.0
    %857 = vmatpush1.msra.mxu0 0.0
    %858 = vmatprep.subr.mxu0 0.0
    %859 = vmatpush1.msra.mxu0 0.0
    %860 = vmatprep.subr.mxu0 0.0
    %861 = vmatpush1.msra.mxu0 0.0
    %862 = vmatprep.subr.mxu0 0.0
    %863 = vmatpush1.msra.mxu0 0.0
    %864 = vmatprep.subr.mxu0 0.0
    %865 = vmatpush1.msra.mxu0 0.0
    %866 = vmatprep.subr.mxu0 0.0
    %867 = vmatpush1.msra.mxu0 0.0
    %868 = vmatprep.subr.mxu0 0.0
    %869 = vmatpush1.msra.mxu0 0.0
    %870 = vmatprep.subr.mxu0 0.0
    %871 = vmatpush1.msra.mxu0 0.0
    %872 = vmatprep.subr.mxu0 0.0
    %873 = vmatpush1.msra.mxu0 0.0
    %874 = vmatprep.subr.mxu0 0.0
    %875 = vmatpush1.msra.mxu0 0.0
    %876 = vmatprep.subr.mxu0 0.0
    %877 = vmatpush1.msra.mxu0 0.0
    %878 = vmatprep.subr.mxu0 0.0
    %879 = vmatpush1.msra.mxu0 0.0
    %880 = vmatprep.subr.mxu0 0.0
    %881 = vmatpush1.msra.mxu0 0.0
    %882 = vmatprep.subr.mxu0 0.0
    %883 = vmatpush1.msra.mxu0 0.0
    %884 = vmatprep.subr.mxu0 0.0
    %885 = vmatpush1.msra.mxu0 0.0
    %886 = vmatprep.mubr.f32.mxu0 0.0
    %887 = vmatmul.mubr.f32.gmra.mrb[0].mxu0 %v814
    %v888 = vpop.f32.mrb[0].mxu0
    %v889 = vadd.f32 0.0, %v888
    %v890 = vpop.f32.mrb[0].mxu0
    %891 = vmatprep.mubr.f32.mxu0 0.0
    %892 = vmatmul.mubr.f32.gmra.mrb[0].mxu0 %v817
    %v893 = vpop.f32.mrb[0].mxu0
    %v894 = vadd.f32 0.0, %v893
    %v895 = vpop.f32.mrb[0].mxu0
    %896 = vdwg.mxu0
    %v897 = vadd.f32 %v692, %v889
    %v898 = vadd.f32 %v697, %v894
    %899 = vrot.lane.b32.xlu0 %v140, 104
    %v900 = vpop.permute.xlu0 %899
    %901 = vrot.lane.b32.xlu0 %v146, 104
    %v902 = vpop.permute.xlu0 %901
    %903 = vrot.lane.b32.xlu0 %v240, 72
    %v904 = vpop.permute.xlu0 %903
    %905 = vrot.lane.b32.xlu0 %v246, 72
    %v906 = vpop.permute.xlu0 %905
    %v907 = vsel %vm301, %v900, 0
    %v909 = vsel %vm301, %v902, 0
    %v911 = vsel %vm301, %v904, 0
    %v913 = vsel %vm301, %v906, 0
    %915 = vmatprep.subr.mxu0 0.0
    %916 = vmatpush1.xpose.msra.mxu0 %v911
    %917 = vmatprep.subr.mxu0 0.0
    %918 = vmatpush1.xpose.msra.mxu0 %v913
    %919 = vmatprep.subr.mxu0 0.0
    %920 = vmatpush1.xpose.msra.mxu0 0.0
    %921 = vmatprep.subr.mxu0 0.0
    %922 = vmatpush1.xpose.msra.mxu0 0.0
    %923 = vmatprep.subr.mxu0 0.0
    %924 = vmatpush1.xpose.msra.mxu0 0.0
    %925 = vmatprep.subr.mxu0 0.0
    %926 = vmatpush1.xpose.msra.mxu0 0.0
    %927 = vmatprep.subr.mxu0 0.0
    %928 = vmatpush1.xpose.msra.mxu0 0.0
    %929 = vmatprep.subr.mxu0 0.0
    %930 = vmatpush1.xpose.msra.mxu0 0.0
    %931 = vmatprep.subr.mxu0 0.0
    %932 = vmatpush1.xpose.msra.mxu0 0.0
    %933 = vmatprep.subr.mxu0 0.0
    %934 = vmatpush1.xpose.msra.mxu0 0.0
    %935 = vmatprep.subr.mxu0 0.0
    %936 = vmatpush1.xpose.msra.mxu0 0.0
    %937 = vmatprep.subr.mxu0 0.0
    %938 = vmatpush1.xpose.msra.mxu0 0.0
    %939 = vmatprep.subr.mxu0 0.0
    %940 = vmatpush1.xpose.msra.mxu0 0.0
    %941 = vmatprep.subr.mxu0 0.0
    %942 = vmatpush1.xpose.msra.mxu0 0.0
    %943 = vmatprep.subr.mxu0 0.0
    %944 = vmatpush1.xpose.msra.mxu0 0.0
    %945 = vmatprep.subr.mxu0 0.0
    %946 = vmatpush1.xpose.msra.mxu0 0.0
    %947 = vmatprep.subr.mxu0 0.0
    %948 = vmatpush1.xpose.msra.mxu0 0.0
    %949 = vmatprep.subr.mxu0 0.0
    %950 = vmatpush1.xpose.msra.mxu0 0.0
    %951 = vmatprep.subr.mxu0 0.0
    %952 = vmatpush1.xpose.msra.mxu0 0.0
    %953 = vmatprep.subr.mxu0 0.0
    %954 = vmatpush1.xpose.msra.mxu0 0.0
    %955 = vmatprep.subr.mxu0 0.0
    %956 = vmatpush1.xpose.msra.mxu0 0.0
    %957 = vmatprep.subr.mxu0 0.0
    %958 = vmatpush1.xpose.msra.mxu0 0.0
    %959 = vmatprep.subr.mxu0 0.0
    %960 = vmatpush1.xpose.msra.mxu0 0.0
    %961 = vmatprep.subr.mxu0 0.0
    %962 = vmatpush1.xpose.msra.mxu0 0.0
    %963 = vmatprep.subr.mxu0 0.0
    %964 = vmatpush1.xpose.msra.mxu0 0.0
    %965 = vmatprep.subr.mxu0 0.0
    %966 = vmatpush1.xpose.msra.mxu0 0.0
    %967 = vmatprep.subr.mxu0 0.0
    %968 = vmatpush1.xpose.msra.mxu0 0.0
    %969 = vmatprep.subr.mxu0 0.0
    %970 = vmatpush1.xpose.msra.mxu0 0.0
    %971 = vmatprep.subr.mxu0 0.0
    %972 = vmatpush1.xpose.msra.mxu0 0.0
    %973 = vmatprep.subr.mxu0 0.0
    %974 = vmatpush1.xpose.msra.mxu0 0.0
    %975 = vmatprep.subr.mxu0 0.0
    %976 = vmatpush1.xpose.msra.mxu0 0.0
    %977 = vmatprep.subr.mxu0 0.0
    %978 = vmatpush1.xpose.msra.mxu0 0.0
    %979 = vmatprep.mubr.f32.mxu0 0.0
    %980 = vmatmul.mubr.f32.gmra.mrb[0].mxu0 %v907
    %v981 = vpop.f32.mrb[0].mxu0
    %v982 = vadd.f32 %v293, %v981
    %v983 = vpop.f32.mrb[0].mxu0
    %984 = vmatprep.mubr.f32.mxu0 0.0
    %985 = vmatmul.mubr.f32.gmra.mrb[0].mxu0 %v909
    %v986 = vpop.f32.mrb[0].mxu0
    %v987 = vadd.f32 %v294, %v986
    %v988 = vpop.f32.mrb[0].mxu0
    %989 = vdwg.mxu0
    %v990 = vsel %vm387, %v982, -inf
    %991 = vmax.xlane.f32.xlu0 %v990
    %v992 = vpop.xlane.xlu0 %991
    %v993 = vsel %vm387, %v987, -inf
    %994 = vmax.xlane.f32.xlu0 %v993
    %v995 = vpop.xlane.xlu0 %994
    %v996 = vsub.f32 %v982, %v992
    %v997 = vsub.f32 %v987, %v995
    %v998 = vmul.f32 %v996, 1.442695
    %v999 = vpow.pop %v998
    %v1000 = vmul.f32 %v997, 1.442695
    %v1001 = vpow.pop %v1000
    %v1002 = vsel %vm387, %v999, 0.0
    %1003 = vadd.xlane.f32.xlu0 %v1002
    %v1004 = vpop.xlane.xlu0 %1003
    %v1005 = vsel %vm387, %v1001, 0.0
    %1006 = vadd.xlane.f32.xlu0 %v1005
    %v1007 = vpop.xlane.xlu0 %1006
    %v1008 = vrcp.pop %v1004
    %v1009 = vmul.f32 %v999, %v1008
    %v1010 = vrcp.pop %v1007
    %v1011 = vmul.f32 %v1001, %v1010
    %1013 = vrot.lane.b32.xlu0 %v242, 96
    %v1014 = vpop.permute.xlu0 %1013
    %1015 = vrot.lane.b32.xlu0 %v248, 96
    %v1016 = vpop.permute.xlu0 %1015
    %v1019 = vsel %vm387, %v1009, 0
    %v1022 = vsel %vm387, %v1011, 0
    %v1024 = vsel %vm534, %v1016, 0
    %1026 = vmatprep.subr.mxu0 0.0
    %1027 = vmatpush1.msra.mxu0 %v1014
    %1028 = vmatprep.subr.mxu0 0.0
    %1029 = vmatpush1.msra.mxu0 %v1024
    %1030 = vmatprep.subr.mxu0 0.0
    %1031 = vmatpush1.msra.mxu0 0.0
    %1032 = vmatprep.subr.mxu0 0.0
    %1033 = vmatpush1.msra.mxu0 0.0
    %1034 = vmatprep.subr.mxu0 0.0
    %1035 = vmatpush1.msra.mxu0 0.0
    %1036 = vmatprep.subr.mxu0 0.0
    %1037 = vmatpush1.msra.mxu0 0.0
    %1038 = vmatprep.subr.mxu0 0.0
    %1039 = vmatpush1.msra.mxu0 0.0
    %1040 = vmatprep.subr.mxu0 0.0
    %1041 = vmatpush1.msra.mxu0 0.0
    %1042 = vmatprep.subr.mxu0 0.0
    %1043 = vmatpush1.msra.mxu0 0.0
    %1044 = vmatprep.subr.mxu0 0.0
    %1045 = vmatpush1.msra.mxu0 0.0
    %1046 = vmatprep.subr.mxu0 0.0
    %1047 = vmatpush1.msra.mxu0 0.0
    %1048 = vmatprep.subr.mxu0 0.0
    %1049 = vmatpush1.msra.mxu0 0.0
    %1050 = vmatprep.subr.mxu0 0.0
    %1051 = vmatpush1.msra.mxu0 0.0
    %1052 = vmatprep.subr.mxu0 0.0
    %1053 = vmatpush1.msra.mxu0 0.0
    %1054 = vmatprep.subr.mxu0 0.0
    %1055 = vmatpush1.msra.mxu0 0.0
    %1056 = vmatprep.subr.mxu0 0.0
    %1057 = vmatpush1.msra.mxu0 0.0
    %1058 = vmatprep.subr.mxu0 0.0
    %1059 = vmatpush1.msra.mxu0 0.0
    %1060 = vmatprep.subr.mxu0 0.0
    %1061 = vmatpush1.msra.mxu0 0.0
    %1062 = vmatprep.subr.mxu0 0.0
    %1063 = vmatpush1.msra.mxu0 0.0
    %1064 = vmatprep.subr.mxu0 0.0
    %1065 = vmatpush1.msra.mxu0 0.0
    %1066 = vmatprep.subr.mxu0 0.0
    %1067 = vmatpush1.msra.mxu0 0.0
    %1068 = vmatprep.subr.mxu0 0.0
    %1069 = vmatpush1.msra.mxu0 0.0
    %1070 = vmatprep.subr.mxu0 0.0
    %1071 = vmatpush1.msra.mxu0 0.0
    %1072 = vmatprep.subr.mxu0 0.0
    %1073 = vmatpush1.msra.mxu0 0.0
    %1074 = vmatprep.subr.mxu0 0.0
    %1075 = vmatpush1.msra.mxu0 0.0
    %1076 = vmatprep.subr.mxu0 0.0
    %1077 = vmatpush1.msra.mxu0 0.0
    %1078 = vmatprep.subr.mxu0 0.0
    %1079 = vmatpush1.msra.mxu0 0.0
    %1080 = vmatprep.subr.mxu0 0.0
    %1081 = vmatpush1.msra.mxu0 0.0
    %1082 = vmatprep.subr.mxu0 0.0
    %1083 = vmatpush1.msra.mxu0 0.0
    %1084 = vmatprep.subr.mxu0 0.0
    %1085 = vmatpush1.msra.mxu0 0.0
    %1086 = vmatprep.subr.mxu0 0.0
    %1087 = vmatpush1.msra.mxu0 0.0
    %1088 = vmatprep.subr.mxu0 0.0
    %1089 = vmatpush1.msra.mxu0 0.0
    %1090 = vmatprep.mubr.f32.mxu0 0.0
    %1091 = vmatmul.mubr.f32.gmra.mrb[0].mxu0 %v1019
    %v1092 = vpop.f32.mrb[0].mxu0
    %v1093 = vadd.f32 0.0, %v1092
    %v1094 = vpop.f32.mrb[0].mxu0
    %1095 = vmatprep.mubr.f32.mxu0 0.0
    %1096 = vmatmul.mubr.f32.gmra.mrb[0].mxu0 %v1022
    %v1097 = vpop.f32.mrb[0].mxu0
    %v1098 = vadd.f32 0.0, %v1097
    %v1099 = vpop.f32.mrb[0].mxu0
    %1100 = vdwg.mxu0
    %v1101 = vadd.f32 %v897, %v1093
    %v1102 = vadd.f32 %v898, %v1098
    %v1103 = vlaneseq
    %v1104 = vshrl.u32 %v1103, 7
    %v1105 = vsub.s32 2, %v1104
    %v1106 = vrot.slane %v48, %v1105
    %v1107 = vadd.f32 %v1101, %v1106
    %v1108 = vadd.f32 %v1102, %v1106
    %1109 = vrot.lane.b32.xlu0 %v140, 96
    %v1110 = vpop.permute.xlu0 %1109
    %1111 = vrot.lane.b32.xlu0 %v146, 96
    %v1112 = vpop.permute.xlu0 %1111
    %v1113 = vsel %vm301, %v240, 0
    %v1115 = vsel %vm301, %v246, 0
    %v1117 = vsel %vm301, %v1110, 0
    %v1119 = vsel %vm301, %v1112, 0
    %1121 = vmatprep.subr.mxu0 0.0
    %1122 = vmatpush1.xpose.msra.mxu0 %v1117
    %1123 = vmatprep.subr.mxu0 0.0
    %1124 = vmatpush1.xpose.msra.mxu0 %v1119
    %1125 = vmatprep.subr.mxu0 0.0
    %1126 = vmatpush1.xpose.msra.mxu0 0.0
    %1127 = vmatprep.subr.mxu0 0.0
    %1128 = vmatpush1.xpose.msra.mxu0 0.0
    %1129 = vmatprep.subr.mxu0 0.0
    %1130 = vmatpush1.xpose.msra.mxu0 0.0
    %1131 = vmatprep.subr.mxu0 0.0
    %1132 = vmatpush1.xpose.msra.mxu0 0.0
    %1133 = vmatprep.subr.mxu0 0.0
    %1134 = vmatpush1.xpose.msra.mxu0 0.0
    %1135 = vmatprep.subr.mxu0 0.0
    %1136 = vmatpush1.xpose.msra.mxu0 0.0
    %1137 = vmatprep.subr.mxu0 0.0
    %1138 = vmatpush1.xpose.msra.mxu0 0.0
    %1139 = vmatprep.subr.mxu0 0.0
    %1140 = vmatpush1.xpose.msra.mxu0 0.0
    %1141 = vmatprep.subr.mxu0 0.0
    %1142 = vmatpush1.xpose.msra.mxu0 0.0
    %1143 = vmatprep.subr.mxu0 0.0
    %1144 = vmatpush1.xpose.msra.mxu0 0.0
    %1145 = vmatprep.subr.mxu0 0.0
    %1146 = vmatpush1.xpose.msra.mxu0 0.0
    %1147 = vmatprep.subr.mxu0 0.0
    %1148 = vmatpush1.xpose.msra.mxu0 0.0
    %1149 = vmatprep.subr.mxu0 0.0
    %1150 = vmatpush1.xpose.msra.mxu0 0.0
    %1151 = vmatprep.subr.mxu0 0.0
    %1152 = vmatpush1.xpose.msra.mxu0 0.0
    %1153 = vmatprep.subr.mxu0 0.0
    %1154 = vmatpush1.xpose.msra.mxu0 0.0
    %1155 = vmatprep.subr.mxu0 0.0
    %1156 = vmatpush1.xpose.msra.mxu0 0.0
    %1157 = vmatprep.subr.mxu0 0.0
    %1158 = vmatpush1.xpose.msra.mxu0 0.0
    %1159 = vmatprep.subr.mxu0 0.0
    %1160 = vmatpush1.xpose.msra.mxu0 0.0
    %1161 = vmatprep.subr.mxu0 0.0
    %1162 = vmatpush1.xpose.msra.mxu0 0.0
    %1163 = vmatprep.subr.mxu0 0.0
    %1164 = vmatpush1.xpose.msra.mxu0 0.0
    %1165 = vmatprep.subr.mxu0 0.0
    %1166 = vmatpush1.xpose.msra.mxu0 0.0
    %1167 = vmatprep.subr.mxu0 0.0
    %1168 = vmatpush1.xpose.msra.mxu0 0.0
    %1169 = vmatprep.subr.mxu0 0.0
    %1170 = vmatpush1.xpose.msra.mxu0 0.0
    %1171 = vmatprep.subr.mxu0 0.0
    %1172 = vmatpush1.xpose.msra.mxu0 0.0
    %1173 = vmatprep.subr.mxu0 0.0
    %1174 = vmatpush1.xpose.msra.mxu0 0.0
    %1175 = vmatprep.subr.mxu0 0.0
    %1176 = vmatpush1.xpose.msra.mxu0 0.0
    %1177 = vmatprep.subr.mxu0 0.0
    %1178 = vmatpush1.xpose.msra.mxu0 0.0
    %1179 = vmatprep.subr.mxu0 0.0
    %1180 = vmatpush1.xpose.msra.mxu0 0.0
    %1181 = vmatprep.subr.mxu0 0.0
    %1182 = vmatpush1.xpose.msra.mxu0 0.0
    %1183 = vmatprep.subr.mxu0 0.0
    %1184 = vmatpush1.xpose.msra.mxu0 0.0
    %1185 = vmatprep.mubr.f32.mxu0 0.0
    %1186 = vmatmul.mubr.f32.gmra.mrb[0].mxu0 %v1113
    %v1187 = vpop.f32.mrb[0].mxu0
    %v1188 = vadd.f32 %v293, %v1187
    %v1189 = vpop.f32.mrb[0].mxu0
    %1190 = vmatprep.mubr.f32.mxu0 0.0
    %1191 = vmatmul.mubr.f32.gmra.mrb[0].mxu0 %v1115
    %v1192 = vpop.f32.mrb[0].mxu0
    %v1193 = vadd.f32 %v294, %v1192
    %v1194 = vpop.f32.mrb[0].mxu0
    %1195 = vdwg.mxu0
    %vm1196 = vcmask 130048
    %v1197 = vsel %vm1196, %v1188, -inf
    %1198 = vmax.xlane.f32.xlu0 %v1197
    %v1199 = vpop.xlane.xlu0 %1198
    %vm1200 = vcmask 125952
    %v1201 = vsel %vm1200, %v1193, -inf
    %1202 = vmax.xlane.f32.xlu0 %v1201
    %v1203 = vpop.xlane.xlu0 %1202
    %v1204 = vsub.f32 %v1188, %v1199
    %v1205 = vsub.f32 %v1193, %v1203
    %v1206 = vmul.f32 %v1204, 1.442695
    %v1207 = vpow.pop %v1206
    %v1208 = vmul.f32 %v1205, 1.442695
    %v1209 = vpow.pop %v1208
    %v1210 = vsel %vm1196, %v1207, 0.0
    %1211 = vadd.xlane.f32.xlu0 %v1210
    %v1212 = vpop.xlane.xlu0 %1211
    %v1213 = vsel %vm1200, %v1209, 0.0
    %1214 = vadd.xlane.f32.xlu0 %v1213
    %v1215 = vpop.xlane.xlu0 %1214
    %v1216 = vrcp.pop %v1212
    %v1217 = vmul.f32 %v1207, %v1216
    %v1218 = vrcp.pop %v1215
    %v1219 = vmul.f32 %v1209, %v1218
    %1220 = vrot.lane.b32.xlu0 %v240, 120
    %v1221 = vpop.permute.xlu0 %1220
    %1222 = vrot.lane.b32.xlu0 %v246, 120
    %v1223 = vpop.permute.xlu0 %1222
    %1224 = vrot.lane.b32.xlu0 %v140, 88
    %v1225 = vpop.permute.xlu0 %1224
    %1226 = vrot.lane.b32.xlu0 %v146, 88
    %v1227 = vpop.permute.xlu0 %1226
    %v1228 = vsel %vm301, %v1221, 0
    %v1230 = vsel %vm301, %v1223, 0
    %v1232 = vsel %vm301, %v1225, 0
    %v1234 = vsel %vm301, %v1227, 0
    %1236 = vmatprep.subr.mxu0 0.0
    %1237 = vmatpush1.xpose.msra.mxu0 %v1232
    %1238 = vmatprep.subr.mxu0 0.0
    %1239 = vmatpush1.xpose.msra.mxu0 %v1234
    %1240 = vmatprep.subr.mxu0 0.0
    %1241 = vmatpush1.xpose.msra.mxu0 0.0
    %1242 = vmatprep.subr.mxu0 0.0
    %1243 = vmatpush1.xpose.msra.mxu0 0.0
    %1244 = vmatprep.subr.mxu0 0.0
    %1245 = vmatpush1.xpose.msra.mxu0 0.0
    %1246 = vmatprep.subr.mxu0 0.0
    %1247 = vmatpush1.xpose.msra.mxu0 0.0
    %1248 = vmatprep.subr.mxu0 0.0
    %1249 = vmatpush1.xpose.msra.mxu0 0.0
    %1250 = vmatprep.subr.mxu0 0.0
    %1251 = vmatpush1.xpose.msra.mxu0 0.0
    %1252 = vmatprep.subr.mxu0 0.0
    %1253 = vmatpush1.xpose.msra.mxu0 0.0
    %1254 = vmatprep.subr.mxu0 0.0
    %1255 = vmatpush1.xpose.msra.mxu0 0.0
    %1256 = vmatprep.subr.mxu0 0.0
    %1257 = vmatpush1.xpose.msra.mxu0 0.0
    %1258 = vmatprep.subr.mxu0 0.0
    %1259 = vmatpush1.xpose.msra.mxu0 0.0
    %1260 = vmatprep.subr.mxu0 0.0
    %1261 = vmatpush1.xpose.msra.mxu0 0.0
    %1262 = vmatprep.subr.mxu0 0.0
    %1263 = vmatpush1.xpose.msra.mxu0 0.0
    %1264 = vmatprep.subr.mxu0 0.0
    %1265 = vmatpush1.xpose.msra.mxu0 0.0
    %1266 = vmatprep.subr.mxu0 0.0
    %1267 = vmatpush1.xpose.msra.mxu0 0.0
    %1268 = vmatprep.subr.mxu0 0.0
    %1269 = vmatpush1.xpose.msra.mxu0 0.0
    %1270 = vmatprep.subr.mxu0 0.0
    %1271 = vmatpush1.xpose.msra.mxu0 0.0
    %1272 = vmatprep.subr.mxu0 0.0
    %1273 = vmatpush1.xpose.msra.mxu0 0.0
    %1274 = vmatprep.subr.mxu0 0.0
    %1275 = vmatpush1.xpose.msra.mxu0 0.0
    %1276 = vmatprep.subr.mxu0 0.0
    %1277 = vmatpush1.xpose.msra.mxu0 0.0
    %1278 = vmatprep.subr.mxu0 0.0
    %1279 = vmatpush1.xpose.msra.mxu0 0.0
    %1280 = vmatprep.subr.mxu0 0.0
    %1281 = vmatpush1.xpose.msra.mxu0 0.0
    %1282 = vmatprep.subr.mxu0 0.0
    %1283 = vmatpush1.xpose.msra.mxu0 0.0
    %1284 = vmatprep.subr.mxu0 0.0
    %1285 = vmatpush1.xpose.msra.mxu0 0.0
    %1286 = vmatprep.subr.mxu0 0.0
    %1287 = vmatpush1.xpose.msra.mxu0 0.0
    %1288 = vmatprep.subr.mxu0 0.0
    %1289 = vmatpush1.xpose.msra.mxu0 0.0
    %1290 = vmatprep.subr.mxu0 0.0
    %1291 = vmatpush1.xpose.msra.mxu0 0.0
    %1292 = vmatprep.subr.mxu0 0.0
    %1293 = vmatpush1.xpose.msra.mxu0 0.0
    %1294 = vmatprep.subr.mxu0 0.0
    %1295 = vmatpush1.xpose.msra.mxu0 0.0
    %1296 = vmatprep.subr.mxu0 0.0
    %1297 = vmatpush1.xpose.msra.mxu0 0.0
    %1298 = vmatprep.subr.mxu0 0.0
    %1299 = vmatpush1.xpose.msra.mxu0 0.0
    %1300 = vmatprep.mubr.f32.mxu0 0.0
    %1301 = vmatmul.mubr.f32.gmra.mrb[0].mxu0 %v1228
    %v1302 = vpop.f32.mrb[0].mxu0
    %v1303 = vadd.f32 %v293, %v1302
    %v1304 = vpop.f32.mrb[0].mxu0
    %1305 = vmatprep.mubr.f32.mxu0 0.0
    %1306 = vmatmul.mubr.f32.gmra.mrb[0].mxu0 %v1230
    %v1307 = vpop.f32.mrb[0].mxu0
    %v1308 = vadd.f32 %v294, %v1307
    %v1309 = vpop.f32.mrb[0].mxu0
    %1310 = vdwg.mxu0
    %v1311 = vsel %vm1196, %v1303, -inf
    %1312 = vmax.xlane.f32.xlu0 %v1311
    %v1313 = vpop.xlane.xlu0 %1312
    %v1314 = vsel %vm1200, %v1308, -inf
    %1315 = vmax.xlane.f32.xlu0 %v1314
    %v1316 = vpop.xlane.xlu0 %1315
    %v1317 = vsub.f32 %v1303, %v1313
    %v1318 = vsub.f32 %v1308, %v1316
    %v1319 = vmul.f32 %v1317, 1.442695
    %v1320 = vpow.pop %v1319
    %v1321 = vmul.f32 %v1318, 1.442695
    %v1322 = vpow.pop %v1321
    %v1323 = vsel %vm1196, %v1320, 0.0
    %1324 = vadd.xlane.f32.xlu0 %v1323
    %v1325 = vpop.xlane.xlu0 %1324
    %v1326 = vsel %vm1200, %v1322, 0.0
    %1327 = vadd.xlane.f32.xlu0 %v1326
    %v1328 = vpop.xlane.xlu0 %1327
    %v1329 = vrcp.pop %v1325
    %v1330 = vmul.f32 %v1320, %v1329
    %v1331 = vrcp.pop %v1328
    %v1332 = vmul.f32 %v1322, %v1331
    %1333 = vrot.lane.b32.xlu0 %v140, 32
    %v1334 = vpop.permute.xlu0 %1333
    %1335 = vrot.lane.b32.xlu0 %v146, 32
    %v1336 = vpop.permute.xlu0 %1335
    %v1340 = vsel %vm1196, %v1330, 0
    %v1343 = vsel %vm1196, %v1332, 0
    %1345 = vmatprep.subr.mxu0 0.0
    %1346 = vmatpush1.msra.mxu0 %v1334
    %1347 = vmatprep.subr.mxu0 0.0
    %1348 = vmatpush1.msra.mxu0 %v1336
    %1349 = vmatprep.subr.mxu0 0.0
    %1350 = vmatpush1.msra.mxu0 0.0
    %1351 = vmatprep.subr.mxu0 0.0
    %1352 = vmatpush1.msra.mxu0 0.0
    %1353 = vmatprep.subr.mxu0 0.0
    %1354 = vmatpush1.msra.mxu0 0.0
    %1355 = vmatprep.subr.mxu0 0.0
    %1356 = vmatpush1.msra.mxu0 0.0
    %1357 = vmatprep.subr.mxu0 0.0
    %1358 = vmatpush1.msra.mxu0 0.0
    %1359 = vmatprep.subr.mxu0 0.0
    %1360 = vmatpush1.msra.mxu0 0.0
    %1361 = vmatprep.subr.mxu0 0.0
    %1362 = vmatpush1.msra.mxu0 0.0
    %1363 = vmatprep.subr.mxu0 0.0
    %1364 = vmatpush1.msra.mxu0 0.0
    %1365 = vmatprep.subr.mxu0 0.0
    %1366 = vmatpush1.msra.mxu0 0.0
    %1367 = vmatprep.subr.mxu0 0.0
    %1368 = vmatpush1.msra.mxu0 0.0
    %1369 = vmatprep.subr.mxu0 0.0
    %1370 = vmatpush1.msra.mxu0 0.0
    %1371 = vmatprep.subr.mxu0 0.0
    %1372 = vmatpush1.msra.mxu0 0.0
    %1373 = vmatprep.subr.mxu0 0.0
    %1374 = vmatpush1.msra.mxu0 0.0
    %1375 = vmatprep.subr.mxu0 0.0
    %1376 = vmatpush1.msra.mxu0 0.0
    %1377 = vmatprep.subr.mxu0 0.0
    %1378 = vmatpush1.msra.mxu0 0.0
    %1379 = vmatprep.subr.mxu0 0.0
    %1380 = vmatpush1.msra.mxu0 0.0
    %1381 = vmatprep.subr.mxu0 0.0
    %1382 = vmatpush1.msra.mxu0 0.0
    %1383 = vmatprep.subr.mxu0 0.0
    %1384 = vmatpush1.msra.mxu0 0.0
    %1385 = vmatprep.subr.mxu0 0.0
    %1386 = vmatpush1.msra.mxu0 0.0
    %1387 = vmatprep.subr.mxu0 0.0
    %1388 = vmatpush1.msra.mxu0 0.0
    %1389 = vmatprep.subr.mxu0 0.0
    %1390 = vmatpush1.msra.mxu0 0.0
    %1391 = vmatprep.subr.mxu0 0.0
    %1392 = vmatpush1.msra.mxu0 0.0
    %1393 = vmatprep.subr.mxu0 0.0
    %1394 = vmatpush1.msra.mxu0 0.0
    %1395 = vmatprep.subr.mxu0 0.0
    %1396 = vmatpush1.msra.mxu0 0.0
    %1397 = vmatprep.subr.mxu0 0.0
    %1398 = vmatpush1.msra.mxu0 0.0
    %1399 = vmatprep.subr.mxu0 0.0
    %1400 = vmatpush1.msra.mxu0 0.0
    %1401 = vmatprep.subr.mxu0 0.0
    %1402 = vmatpush1.msra.mxu0 0.0
    %1403 = vmatprep.subr.mxu0 0.0
    %1404 = vmatpush1.msra.mxu0 0.0
    %1405 = vmatprep.subr.mxu0 0.0
    %1406 = vmatpush1.msra.mxu0 0.0
    %1407 = vmatprep.subr.mxu0 0.0
    %1408 = vmatpush1.msra.mxu0 0.0
    %1409 = vmatprep.mubr.f32.mxu0 0.0
    %1410 = vmatmul.mubr.f32.gmra.mrb[0].mxu0 %v1340
    %v1411 = vpop.f32.mrb[0].mxu0
    %v1412 = vadd.f32 0.0, %v1411
    %v1413 = vpop.f32.mrb[0].mxu0
    %1414 = vmatprep.mubr.f32.mxu0 0.0
    %1415 = vmatmul.mubr.f32.gmra.mrb[0].mxu0 %v1343
    %v1416 = vpop.f32.mrb[0].mxu0
    %v1417 = vadd.f32 0.0, %v1416
    %v1418 = vpop.f32.mrb[0].mxu0
    %1419 = vdwg.mxu0
    %1420 = vrot.lane.b32.xlu0 %v140, 64
    %v1421 = vpop.permute.xlu0 %1420
    %1422 = vrot.lane.b32.xlu0 %v146, 64
    %v1423 = vpop.permute.xlu0 %1422
    %v1427 = vsel %vm1196, %v1217, 0
    %v1430 = vsel %vm1196, %v1219, 0
    %1432 = vmatprep.subr.mxu0 0.0
    %1433 = vmatpush1.msra.mxu0 %v1421
    %1434 = vmatprep.subr.mxu0 0.0
    %1435 = vmatpush1.msra.mxu0 %v1423
    %1436 = vmatprep.subr.mxu0 0.0
    %1437 = vmatpush1.msra.mxu0 0.0
    %1438 = vmatprep.subr.mxu0 0.0
    %1439 = vmatpush1.msra.mxu0 0.0
    %1440 = vmatprep.subr.mxu0 0.0
    %1441 = vmatpush1.msra.mxu0 0.0
    %1442 = vmatprep.subr.mxu0 0.0
    %1443 = vmatpush1.msra.mxu0 0.0
    %1444 = vmatprep.subr.mxu0 0.0
    %1445 = vmatpush1.msra.mxu0 0.0
    %1446 = vmatprep.subr.mxu0 0.0
    %1447 = vmatpush1.msra.mxu0 0.0
    %1448 = vmatprep.subr.mxu0 0.0
    %1449 = vmatpush1.msra.mxu0 0.0
    %1450 = vmatprep.subr.mxu0 0.0
    %1451 = vmatpush1.msra.mxu0 0.0
    %1452 = vmatprep.subr.mxu0 0.0
    %1453 = vmatpush1.msra.mxu0 0.0
    %1454 = vmatprep.subr.mxu0 0.0
    %1455 = vmatpush1.msra.mxu0 0.0
    %1456 = vmatprep.subr.mxu0 0.0
    %1457 = vmatpush1.msra.mxu0 0.0
    %1458 = vmatprep.subr.mxu0 0.0
    %1459 = vmatpush1.msra.mxu0 0.0
    %1460 = vmatprep.subr.mxu0 0.0
    %1461 = vmatpush1.msra.mxu0 0.0
    %1462 = vmatprep.subr.mxu0 0.0
    %1463 = vmatpush1.msra.mxu0 0.0
    %1464 = vmatprep.subr.mxu0 0.0
    %1465 = vmatpush1.msra.mxu0 0.0
    %1466 = vmatprep.subr.mxu0 0.0
    %1467 = vmatpush1.msra.mxu0 0.0
    %1468 = vmatprep.subr.mxu0 0.0
    %1469 = vmatpush1.msra.mxu0 0.0
    %1470 = vmatprep.subr.mxu0 0.0
    %1471 = vmatpush1.msra.mxu0 0.0
    %1472 = vmatprep.subr.mxu0 0.0
    %1473 = vmatpush1.msra.mxu0 0.0
    %1474 = vmatprep.subr.mxu0 0.0
    %1475 = vmatpush1.msra.mxu0 0.0
    %1476 = vmatprep.subr.mxu0 0.0
    %1477 = vmatpush1.msra.mxu0 0.0
    %1478 = vmatprep.subr.mxu0 0.0
    %1479 = vmatpush1.msra.mxu0 0.0
    %1480 = vmatprep.subr.mxu0 0.0
    %1481 = vmatpush1.msra.mxu0 0.0
    %1482 = vmatprep.subr.mxu0 0.0
    %1483 = vmatpush1.msra.mxu0 0.0
    %1484 = vmatprep.subr.mxu0 0.0
    %1485 = vmatpush1.msra.mxu0 0.0
    %1486 = vmatprep.subr.mxu0 0.0
    %1487 = vmatpush1.msra.mxu0 0.0
    %1488 = vmatprep.subr.mxu0 0.0
    %1489 = vmatpush1.msra.mxu0 0.0
    %1490 = vmatprep.subr.mxu0 0.0
    %1491 = vmatpush1.msra.mxu0 0.0
    %1492 = vmatprep.subr.mxu0 0.0
    %1493 = vmatpush1.msra.mxu0 0.0
    %1494 = vmatprep.subr.mxu0 0.0
    %1495 = vmatpush1.msra.mxu0 0.0
    %1496 = vmatprep.mubr.f32.mxu0 0.0
    %1497 = vmatmul.mubr.f32.gmra.mrb[0].mxu0 %v1427
    %v1498 = vpop.f32.mrb[0].mxu0
    %v1499 = vadd.f32 %v1412, %v1498
    %v1500 = vpop.f32.mrb[0].mxu0
    %1501 = vmatprep.mubr.f32.mxu0 0.0
    %1502 = vmatmul.mubr.f32.gmra.mrb[0].mxu0 %v1430
    %v1503 = vpop.f32.mrb[0].mxu0
    %v1504 = vadd.f32 %v1417, %v1503
    %v1505 = vpop.f32.mrb[0].mxu0
    %1506 = vdwg.mxu0
    %1507 = vrot.lane.b32.xlu0 %v240, 112
    %v1508 = vpop.permute.xlu0 %1507
    %1509 = vrot.lane.b32.xlu0 %v246, 112
    %v1510 = vpop.permute.xlu0 %1509
    %1511 = vrot.lane.b32.xlu0 %v140, 80
    %v1512 = vpop.permute.xlu0 %1511
    %1513 = vrot.lane.b32.xlu0 %v146, 80
    %v1514 = vpop.permute.xlu0 %1513
    %v1515 = vsel %vm301, %v1508, 0
    %v1517 = vsel %vm301, %v1510, 0
    %v1519 = vsel %vm301, %v1512, 0
    %v1521 = vsel %vm301, %v1514, 0
    %1523 = vmatprep.subr.mxu0 0.0
    %1524 = vmatpush1.xpose.msra.mxu0 %v1519
    %1525 = vmatprep.subr.mxu0 0.0
    %1526 = vmatpush1.xpose.msra.mxu0 %v1521
    %1527 = vmatprep.subr.mxu0 0.0
    %1528 = vmatpush1.xpose.msra.mxu0 0.0
    %1529 = vmatprep.subr.mxu0 0.0
    %1530 = vmatpush1.xpose.msra.mxu0 0.0
    %1531 = vmatprep.subr.mxu0 0.0
    %1532 = vmatpush1.xpose.msra.mxu0 0.0
    %1533 = vmatprep.subr.mxu0 0.0
    %1534 = vmatpush1.xpose.msra.mxu0 0.0
    %1535 = vmatprep.subr.mxu0 0.0
    %1536 = vmatpush1.xpose.msra.mxu0 0.0
    %1537 = vmatprep.subr.mxu0 0.0
    %1538 = vmatpush1.xpose.msra.mxu0 0.0
    %1539 = vmatprep.subr.mxu0 0.0
    %1540 = vmatpush1.xpose.msra.mxu0 0.0
    %1541 = vmatprep.subr.mxu0 0.0
    %1542 = vmatpush1.xpose.msra.mxu0 0.0
    %1543 = vmatprep.subr.mxu0 0.0
    %1544 = vmatpush1.xpose.msra.mxu0 0.0
    %1545 = vmatprep.subr.mxu0 0.0
    %1546 = vmatpush1.xpose.msra.mxu0 0.0
    %1547 = vmatprep.subr.mxu0 0.0
    %1548 = vmatpush1.xpose.msra.mxu0 0.0
    %1549 = vmatprep.subr.mxu0 0.0
    %1550 = vmatpush1.xpose.msra.mxu0 0.0
    %1551 = vmatprep.subr.mxu0 0.0
    %1552 = vmatpush1.xpose.msra.mxu0 0.0
    %1553 = vmatprep.subr.mxu0 0.0
    %1554 = vmatpush1.xpose.msra.mxu0 0.0
    %1555 = vmatprep.subr.mxu0 0.0
    %1556 = vmatpush1.xpose.msra.mxu0 0.0
    %1557 = vmatprep.subr.mxu0 0.0
    %1558 = vmatpush1.xpose.msra.mxu0 0.0
    %1559 = vmatprep.subr.mxu0 0.0
    %1560 = vmatpush1.xpose.msra.mxu0 0.0
    %1561 = vmatprep.subr.mxu0 0.0
    %1562 = vmatpush1.xpose.msra.mxu0 0.0
    %1563 = vmatprep.subr.mxu0 0.0
    %1564 = vmatpush1.xpose.msra.mxu0 0.0
    %1565 = vmatprep.subr.mxu0 0.0
    %1566 = vmatpush1.xpose.msra.mxu0 0.0
    %1567 = vmatprep.subr.mxu0 0.0
    %1568 = vmatpush1.xpose.msra.mxu0 0.0
    %1569 = vmatprep.subr.mxu0 0.0
    %1570 = vmatpush1.xpose.msra.mxu0 0.0
    %1571 = vmatprep.subr.mxu0 0.0
    %1572 = vmatpush1.xpose.msra.mxu0 0.0
    %1573 = vmatprep.subr.mxu0 0.0
    %1574 = vmatpush1.xpose.msra.mxu0 0.0
    %1575 = vmatprep.subr.mxu0 0.0
    %1576 = vmatpush1.xpose.msra.mxu0 0.0
    %1577 = vmatprep.subr.mxu0 0.0
    %1578 = vmatpush1.xpose.msra.mxu0 0.0
    %1579 = vmatprep.subr.mxu0 0.0
    %1580 = vmatpush1.xpose.msra.mxu0 0.0
    %1581 = vmatprep.subr.mxu0 0.0
    %1582 = vmatpush1.xpose.msra.mxu0 0.0
    %1583 = vmatprep.subr.mxu0 0.0
    %1584 = vmatpush1.xpose.msra.mxu0 0.0
    %1585 = vmatprep.subr.mxu0 0.0
    %1586 = vmatpush1.xpose.msra.mxu0 0.0
    %1587 = vmatprep.mubr.f32.mxu0 0.0
    %1588 = vmatmul.mubr.f32.gmra.mrb[0].mxu0 %v1515
    %v1589 = vpop.f32.mrb[0].mxu0
    %v1590 = vadd.f32 %v293, %v1589
    %v1591 = vpop.f32.mrb[0].mxu0
    %1592 = vmatprep.mubr.f32.mxu0 0.0
    %1593 = vmatmul.mubr.f32.gmra.mrb[0].mxu0 %v1517
    %v1594 = vpop.f32.mrb[0].mxu0
    %v1595 = vadd.f32 %v294, %v1594
    %v1596 = vpop.f32.mrb[0].mxu0
    %1597 = vdwg.mxu0
    %v1598 = vsel %vm1196, %v1590, -inf
    %1599 = vmax.xlane.f32.xlu0 %v1598
    %v1600 = vpop.xlane.xlu0 %1599
    %v1601 = vsel %vm1200, %v1595, -inf
    %1602 = vmax.xlane.f32.xlu0 %v1601
    %v1603 = vpop.xlane.xlu0 %1602
    %v1604 = vsub.f32 %v1590, %v1600
    %v1605 = vsub.f32 %v1595, %v1603
    %v1606 = vmul.f32 %v1604, 1.442695
    %v1607 = vpow.pop %v1606
    %v1608 = vmul.f32 %v1605, 1.442695
    %v1609 = vpow.pop %v1608
    %v1610 = vsel %vm1196, %v1607, 0.0
    %1611 = vadd.xlane.f32.xlu0 %v1610
    %v1612 = vpop.xlane.xlu0 %1611
    %v1613 = vsel %vm1200, %v1609, 0.0
    %1614 = vadd.xlane.f32.xlu0 %v1613
    %v1615 = vpop.xlane.xlu0 %1614
    %v1616 = vrcp.pop %v1612
    %v1617 = vmul.f32 %v1607, %v1616
    %v1618 = vrcp.pop %v1615
    %v1619 = vmul.f32 %v1609, %v1618
    %v1621 = vsel %vm1196, %v1617, 0
    %v1624 = vsel %vm1196, %v1619, 0
    %1626 = vmatprep.subr.mxu0 0.0
    %1627 = vmatpush1.msra.mxu0 %v142
    %1628 = vmatprep.subr.mxu0 0.0
    %1629 = vmatpush1.msra.mxu0 %v148
    %1630 = vmatprep.subr.mxu0 0.0
    %1631 = vmatpush1.msra.mxu0 0.0
    %1632 = vmatprep.subr.mxu0 0.0
    %1633 = vmatpush1.msra.mxu0 0.0
    %1634 = vmatprep.subr.mxu0 0.0
    %1635 = vmatpush1.msra.mxu0 0.0
    %1636 = vmatprep.subr.mxu0 0.0
    %1637 = vmatpush1.msra.mxu0 0.0
    %1638 = vmatprep.subr.mxu0 0.0
    %1639 = vmatpush1.msra.mxu0 0.0
    %1640 = vmatprep.subr.mxu0 0.0
    %1641 = vmatpush1.msra.mxu0 0.0
    %1642 = vmatprep.subr.mxu0 0.0
    %1643 = vmatpush1.msra.mxu0 0.0
    %1644 = vmatprep.subr.mxu0 0.0
    %1645 = vmatpush1.msra.mxu0 0.0
    %1646 = vmatprep.subr.mxu0 0.0
    %1647 = vmatpush1.msra.mxu0 0.0
    %1648 = vmatprep.subr.mxu0 0.0
    %1649 = vmatpush1.msra.mxu0 0.0
    %1650 = vmatprep.subr.mxu0 0.0
    %1651 = vmatpush1.msra.mxu0 0.0
    %1652 = vmatprep.subr.mxu0 0.0
    %1653 = vmatpush1.msra.mxu0 0.0
    %1654 = vmatprep.subr.mxu0 0.0
    %1655 = vmatpush1.msra.mxu0 0.0
    %1656 = vmatprep.subr.mxu0 0.0
    %1657 = vmatpush1.msra.mxu0 0.0
    %1658 = vmatprep.subr.mxu0 0.0
    %1659 = vmatpush1.msra.mxu0 0.0
    %1660 = vmatprep.subr.mxu0 0.0
    %1661 = vmatpush1.msra.mxu0 0.0
    %1662 = vmatprep.subr.mxu0 0.0
    %1663 = vmatpush1.msra.mxu0 0.0
    %1664 = vmatprep.subr.mxu0 0.0
    %1665 = vmatpush1.msra.mxu0 0.0
    %1666 = vmatprep.subr.mxu0 0.0
    %1667 = vmatpush1.msra.mxu0 0.0
    %1668 = vmatprep.subr.mxu0 0.0
    %1669 = vmatpush1.msra.mxu0 0.0
    %1670 = vmatprep.subr.mxu0 0.0
    %1671 = vmatpush1.msra.mxu0 0.0
    %1672 = vmatprep.subr.mxu0 0.0
    %1673 = vmatpush1.msra.mxu0 0.0
    %1674 = vmatprep.subr.mxu0 0.0
    %1675 = vmatpush1.msra.mxu0 0.0
    %1676 = vmatprep.subr.mxu0 0.0
    %1677 = vmatpush1.msra.mxu0 0.0
    %1678 = vmatprep.subr.mxu0 0.0
    %1679 = vmatpush1.msra.mxu0 0.0
    %1680 = vmatprep.subr.mxu0 0.0
    %1681 = vmatpush1.msra.mxu0 0.0
    %1682 = vmatprep.subr.mxu0 0.0
    %1683 = vmatpush1.msra.mxu0 0.0
    %1684 = vmatprep.subr.mxu0 0.0
    %1685 = vmatpush1.msra.mxu0 0.0
    %1686 = vmatprep.subr.mxu0 0.0
    %1687 = vmatpush1.msra.mxu0 0.0
    %1688 = vmatprep.subr.mxu0 0.0
    %1689 = vmatpush1.msra.mxu0 0.0
    %1690 = vmatprep.mubr.f32.mxu0 0.0
    %1691 = vmatmul.mubr.f32.gmra.mrb[0].mxu0 %v1621
    %v1692 = vpop.f32.mrb[0].mxu0
    %v1693 = vadd.f32 0.0, %v1692
    %v1694 = vpop.f32.mrb[0].mxu0
    %1695 = vmatprep.mubr.f32.mxu0 0.0
    %1696 = vmatmul.mubr.f32.gmra.mrb[0].mxu0 %v1624
    %v1697 = vpop.f32.mrb[0].mxu0
    %v1698 = vadd.f32 0.0, %v1697
    %v1699 = vpop.f32.mrb[0].mxu0
    %1700 = vdwg.mxu0
    %v1701 = vadd.f32 %v1499, %v1693
    %v1702 = vadd.f32 %v1504, %v1698
    %1703 = vrot.lane.b32.xlu0 %v240, 104
    %v1704 = vpop.permute.xlu0 %1703
    %1705 = vrot.lane.b32.xlu0 %v246, 104
    %v1706 = vpop.permute.xlu0 %1705
    %1707 = vrot.lane.b32.xlu0 %v140, 72
    %v1708 = vpop.permute.xlu0 %1707
    %1709 = vrot.lane.b32.xlu0 %v146, 72
    %v1710 = vpop.permute.xlu0 %1709
    %v1711 = vsel %vm301, %v1704, 0
    %v1713 = vsel %vm301, %v1706, 0
    %v1715 = vsel %vm301, %v1708, 0
    %v1717 = vsel %vm301, %v1710, 0
    %1719 = vmatprep.subr.mxu0 0.0
    %1720 = vmatpush1.xpose.msra.mxu0 %v1715
    %1721 = vmatprep.subr.mxu0 0.0
    %1722 = vmatpush1.xpose.msra.mxu0 %v1717
    %1723 = vmatprep.subr.mxu0 0.0
    %1724 = vmatpush1.xpose.msra.mxu0 0.0
    %1725 = vmatprep.subr.mxu0 0.0
    %1726 = vmatpush1.xpose.msra.mxu0 0.0
    %1727 = vmatprep.subr.mxu0 0.0
    %1728 = vmatpush1.xpose.msra.mxu0 0.0
    %1729 = vmatprep.subr.mxu0 0.0
    %1730 = vmatpush1.xpose.msra.mxu0 0.0
    %1731 = vmatprep.subr.mxu0 0.0
    %1732 = vmatpush1.xpose.msra.mxu0 0.0
    %1733 = vmatprep.subr.mxu0 0.0
    %1734 = vmatpush1.xpose.msra.mxu0 0.0
    %1735 = vmatprep.subr.mxu0 0.0
    %1736 = vmatpush1.xpose.msra.mxu0 0.0
    %1737 = vmatprep.subr.mxu0 0.0
    %1738 = vmatpush1.xpose.msra.mxu0 0.0
    %1739 = vmatprep.subr.mxu0 0.0
    %1740 = vmatpush1.xpose.msra.mxu0 0.0
    %1741 = vmatprep.subr.mxu0 0.0
    %1742 = vmatpush1.xpose.msra.mxu0 0.0
    %1743 = vmatprep.subr.mxu0 0.0
    %1744 = vmatpush1.xpose.msra.mxu0 0.0
    %1745 = vmatprep.subr.mxu0 0.0
    %1746 = vmatpush1.xpose.msra.mxu0 0.0
    %1747 = vmatprep.subr.mxu0 0.0
    %1748 = vmatpush1.xpose.msra.mxu0 0.0
    %1749 = vmatprep.subr.mxu0 0.0
    %1750 = vmatpush1.xpose.msra.mxu0 0.0
    %1751 = vmatprep.subr.mxu0 0.0
    %1752 = vmatpush1.xpose.msra.mxu0 0.0
    %1753 = vmatprep.subr.mxu0 0.0
    %1754 = vmatpush1.xpose.msra.mxu0 0.0
    %1755 = vmatprep.subr.mxu0 0.0
    %1756 = vmatpush1.xpose.msra.mxu0 0.0
    %1757 = vmatprep.subr.mxu0 0.0
    %1758 = vmatpush1.xpose.msra.mxu0 0.0
    %1759 = vmatprep.subr.mxu0 0.0
    %1760 = vmatpush1.xpose.msra.mxu0 0.0
    %1761 = vmatprep.subr.mxu0 0.0
    %1762 = vmatpush1.xpose.msra.mxu0 0.0
    %1763 = vmatprep.subr.mxu0 0.0
    %1764 = vmatpush1.xpose.msra.mxu0 0.0
    %1765 = vmatprep.subr.mxu0 0.0
    %1766 = vmatpush1.xpose.msra.mxu0 0.0
    %1767 = vmatprep.subr.mxu0 0.0
    %1768 = vmatpush1.xpose.msra.mxu0 0.0
    %1769 = vmatprep.subr.mxu0 0.0
    %1770 = vmatpush1.xpose.msra.mxu0 0.0
    %1771 = vmatprep.subr.mxu0 0.0
    %1772 = vmatpush1.xpose.msra.mxu0 0.0
    %1773 = vmatprep.subr.mxu0 0.0
    %1774 = vmatpush1.xpose.msra.mxu0 0.0
    %1775 = vmatprep.subr.mxu0 0.0
    %1776 = vmatpush1.xpose.msra.mxu0 0.0
    %1777 = vmatprep.subr.mxu0 0.0
    %1778 = vmatpush1.xpose.msra.mxu0 0.0
    %1779 = vmatprep.subr.mxu0 0.0
    %1780 = vmatpush1.xpose.msra.mxu0 0.0
    %1781 = vmatprep.subr.mxu0 0.0
    %1782 = vmatpush1.xpose.msra.mxu0 0.0
    %1783 = vmatprep.mubr.f32.mxu0 0.0
    %1784 = vmatmul.mubr.f32.gmra.mrb[0].mxu0 %v1711
    %v1785 = vpop.f32.mrb[0].mxu0
    %v1786 = vadd.f32 %v293, %v1785
    %v1787 = vpop.f32.mrb[0].mxu0
    %1788 = vmatprep.mubr.f32.mxu0 0.0
    %1789 = vmatmul.mubr.f32.gmra.mrb[0].mxu0 %v1713
    %v1790 = vpop.f32.mrb[0].mxu0
    %v1791 = vadd.f32 %v294, %v1790
    %v1792 = vpop.f32.mrb[0].mxu0
    %1793 = vdwg.mxu0
    %v1794 = vsel %vm1196, %v1786, -inf
    %1795 = vmax.xlane.f32.xlu0 %v1794
    %v1796 = vpop.xlane.xlu0 %1795
    %v1797 = vsel %vm1200, %v1791, -inf
    %1798 = vmax.xlane.f32.xlu0 %v1797
    %v1799 = vpop.xlane.xlu0 %1798
    %v1800 = vsub.f32 %v1786, %v1796
    %v1801 = vsub.f32 %v1791, %v1799
    %v1802 = vmul.f32 %v1800, 1.442695
    %v1803 = vpow.pop %v1802
    %v1804 = vmul.f32 %v1801, 1.442695
    %v1805 = vpow.pop %v1804
    %v1806 = vsel %vm1196, %v1803, 0.0
    %1807 = vadd.xlane.f32.xlu0 %v1806
    %v1808 = vpop.xlane.xlu0 %1807
    %v1809 = vsel %vm1200, %v1805, 0.0
    %1810 = vadd.xlane.f32.xlu0 %v1809
    %v1811 = vpop.xlane.xlu0 %1810
    %v1812 = vrcp.pop %v1808
    %v1813 = vmul.f32 %v1803, %v1812
    %v1814 = vrcp.pop %v1811
    %v1815 = vmul.f32 %v1805, %v1814
    %1818 = vrot.lane.b32.xlu0 %v142, 96
    %v1819 = vpop.permute.xlu0 %1818
    %1820 = vrot.lane.b32.xlu0 %v148, 96
    %v1821 = vpop.permute.xlu0 %1820
    %v1825 = vsel %vm1196, %v1813, 0
    %v1828 = vsel %vm1196, %v1815, 0
    %1830 = vmatprep.subr.mxu0 0.0
    %1831 = vmatpush1.msra.mxu0 %v1819
    %1832 = vmatprep.subr.mxu0 0.0
    %1833 = vmatpush1.msra.mxu0 %v1821
    %1834 = vmatprep.subr.mxu0 0.0
    %1835 = vmatpush1.msra.mxu0 0.0
    %1836 = vmatprep.subr.mxu0 0.0
    %1837 = vmatpush1.msra.mxu0 0.0
    %1838 = vmatprep.subr.mxu0 0.0
    %1839 = vmatpush1.msra.mxu0 0.0
    %1840 = vmatprep.subr.mxu0 0.0
    %1841 = vmatpush1.msra.mxu0 0.0
    %1842 = vmatprep.subr.mxu0 0.0
    %1843 = vmatpush1.msra.mxu0 0.0
    %1844 = vmatprep.subr.mxu0 0.0
    %1845 = vmatpush1.msra.mxu0 0.0
    %1846 = vmatprep.subr.mxu0 0.0
    %1847 = vmatpush1.msra.mxu0 0.0
    %1848 = vmatprep.subr.mxu0 0.0
    %1849 = vmatpush1.msra.mxu0 0.0
    %1850 = vmatprep.subr.mxu0 0.0
    %1851 = vmatpush1.msra.mxu0 0.0
    %1852 = vmatprep.subr.mxu0 0.0
    %1853 = vmatpush1.msra.mxu0 0.0
    %1854 = vmatprep.subr.mxu0 0.0
    %1855 = vmatpush1.msra.mxu0 0.0
    %1856 = vmatprep.subr.mxu0 0.0
    %1857 = vmatpush1.msra.mxu0 0.0
    %1858 = vmatprep.subr.mxu0 0.0
    %1859 = vmatpush1.msra.mxu0 0.0
    %1860 = vmatprep.subr.mxu0 0.0
    %1861 = vmatpush1.msra.mxu0 0.0
    %1862 = vmatprep.subr.mxu0 0.0
    %1863 = vmatpush1.msra.mxu0 0.0
    %1864 = vmatprep.subr.mxu0 0.0
    %1865 = vmatpush1.msra.mxu0 0.0
    %1866 = vmatprep.subr.mxu0 0.0
    %1867 = vmatpush1.msra.mxu0 0.0
    %1868 = vmatprep.subr.mxu0 0.0
    %1869 = vmatpush1.msra.mxu0 0.0
    %1870 = vmatprep.subr.mxu0 0.0
    %1871 = vmatpush1.msra.mxu0 0.0
    %1872 = vmatprep.subr.mxu0 0.0
    %1873 = vmatpush1.msra.mxu0 0.0
    %1874 = vmatprep.subr.mxu0 0.0
    %1875 = vmatpush1.msra.mxu0 0.0
    %1876 = vmatprep.subr.mxu0 0.0
    %1877 = vmatpush1.msra.mxu0 0.0
    %1878 = vmatprep.subr.mxu0 0.0
    %1879 = vmatpush1.msra.mxu0 0.0
    %1880 = vmatprep.subr.mxu0 0.0
    %1881 = vmatpush1.msra.mxu0 0.0
    %1882 = vmatprep.subr.mxu0 0.0
    %1883 = vmatpush1.msra.mxu0 0.0
    %1884 = vmatprep.subr.mxu0 0.0
    %1885 = vmatpush1.msra.mxu0 0.0
    %1886 = vmatprep.subr.mxu0 0.0
    %1887 = vmatpush1.msra.mxu0 0.0
    %1888 = vmatprep.subr.mxu0 0.0
    %1889 = vmatpush1.msra.mxu0 0.0
    %1890 = vmatprep.subr.mxu0 0.0
    %1891 = vmatpush1.msra.mxu0 0.0
    %1892 = vmatprep.subr.mxu0 0.0
    %1893 = vmatpush1.msra.mxu0 0.0
    %1894 = vmatprep.mubr.f32.mxu0 0.0
    %1895 = vmatmul.mubr.f32.gmra.mrb[0].mxu0 %v1825
    %v1896 = vpop.f32.mrb[0].mxu0
    %v1897 = vadd.f32 0.0, %v1896
    %v1898 = vpop.f32.mrb[0].mxu0
    %1899 = vmatprep.mubr.f32.mxu0 0.0
    %1900 = vmatmul.mubr.f32.gmra.mrb[0].mxu0 %v1828
    %v1901 = vpop.f32.mrb[0].mxu0
    %v1902 = vadd.f32 0.0, %v1901
    %v1903 = vpop.f32.mrb[0].mxu0
    %1904 = vdwg.mxu0
    %v1905 = vadd.f32 %v1701, %v1897
    %v1906 = vadd.f32 %v1702, %v1902
    %v1907 = vlaneseq
    %v1908 = vshrl.u32 %v1907, 7
    %v1909 = vsub.s32 3, %v1908
    %v1910 = vrot.slane %v48, %v1909
    %v1911 = vadd.f32 %v1905, %v1910
    %v1912 = vadd.f32 %v1906, %v1910
    %v1914 = vrot.slane %v1107, 2
    %1915 = vrot.lane.b32.xlu0 %v1914, 32
    %v1916 = vpop.permute.xlu0 %1915
    %v1918 = vrot.slane %v1107, 4
    %1919 = vrot.lane.b32.xlu0 %v1918, 64
    %v1920 = vpop.permute.xlu0 %1919
    %v1922 = vrot.slane %v1107, 6
    %1923 = vrot.lane.b32.xlu0 %v1922, 96
    %v1924 = vpop.permute.xlu0 %1923
    %v1927 = vrot.slane %v1108, 2
    %1928 = vrot.lane.b32.xlu0 %v1927, 32
    %v1929 = vpop.permute.xlu0 %1928
    %v1931 = vrot.slane %v1108, 4
    %1932 = vrot.lane.b32.xlu0 %v1931, 64
    %v1933 = vpop.permute.xlu0 %1932
    %v1935 = vrot.slane %v1108, 6
    %1936 = vrot.lane.b32.xlu0 %v1935, 96
    %v1937 = vpop.permute.xlu0 %1936
    %v1940 = vrot.slane %v1911, 2
    %1941 = vrot.lane.b32.xlu0 %v1940, 32
    %v1942 = vpop.permute.xlu0 %1941
    %v1944 = vrot.slane %v1911, 4
    %1945 = vrot.lane.b32.xlu0 %v1944, 64
    %v1946 = vpop.permute.xlu0 %1945
    %v1948 = vrot.slane %v1911, 6
    %1949 = vrot.lane.b32.xlu0 %v1948, 96
    %v1950 = vpop.permute.xlu0 %1949
    %v1953 = vrot.slane %v1912, 2
    %1954 = vrot.lane.b32.xlu0 %v1953, 32
    %v1955 = vpop.permute.xlu0 %1954
    %v1957 = vsel %vm66, %v1107, %v1916
    %vm1958 = vcmask 523264
    %v1959 = vsel %vm1958, %v1957, %v1920
    %vm1960 = vcmask 785408
    %v1961 = vsel %vm1960, %v1959, %v1924
    %v1962 = vsel %vm66, %v1108, %v1929
    %v1963 = vsel %vm1958, %v1962, %v1933
    %v1964 = vsel %vm1960, %v1963, %v1937
    %v1965 = vsel %vm66, %v1911, %v1942
    %v1966 = vsel %vm1958, %v1965, %v1946
    %v1967 = vsel %vm1960, %v1966, %v1950
    %v1968 = vsel %vm66, %v1912, %v1955
    %v1969 = vld [vmem:[#allocation2] sm:$0xff]
    %v1970 = vld [vmem:[#allocation2 + $0x8] sm:$0xff]
    %v1971 = vld [vmem:[#allocation2 + $0x10] sm:$0xff]
    %v1972 = vld [vmem:[#allocation2 + $0x18] sm:$0xff]
    %v1973 = vld [vmem:[#allocation2 + $0x20] sm:$0xff]
    %v1974 = vld [vmem:[#allocation2 + $0x28] sm:$0xff]
    %v1975 = vld [vmem:[#allocation2 + $0x30] sm:$0xff]
    %v1976 = vld [vmem:[#allocation2 + $0x38] sm:$0xff]
    %v1977 = vld [vmem:[#allocation2 + $0x40] sm:$0xff]
    %v1978 = vld [vmem:[#allocation2 + $0x48] sm:$0xff]
    %v1979 = vld [vmem:[#allocation2 + $0x50] sm:$0xff]
    %v1980 = vld [vmem:[#allocation2 + $0x58] sm:$0xff]
    %v1981 = vld [vmem:[#allocation2 + $0x60] sm:$0xff]
    %v1982 = vld [vmem:[#allocation2 + $0x68] sm:$0xff]
    %v1983 = vld [vmem:[#allocation2 + $0x70] sm:$0xff]
    %v1984 = vld [vmem:[#allocation2 + $0x78] sm:$0xff]
    %v1985 = vld [vmem:[#allocation2 + $0x80] sm:$0xff]
    %v1986 = vld [vmem:[#allocation2 + $0x88] sm:$0xff]
    %v1987 = vld [vmem:[#allocation2 + $0x90] sm:$0xff]
    %v1988 = vld [vmem:[#allocation2 + $0x98] sm:$0xff]
    %v1989 = vld [vmem:[#allocation2 + $0xa0] sm:$0xff]
    %v1990 = vld [vmem:[#allocation2 + $0xa8] sm:$0xff]
    %v1991 = vld [vmem:[#allocation2 + $0xb0] sm:$0xff]
    %v1992 = vld [vmem:[#allocation2 + $0xb8] sm:$0xff]
    %v1993 = vld [vmem:[#allocation2 + $0xc0] sm:$0xff]
    %v1994 = vld [vmem:[#allocation2 + $0xc8] sm:$0xff]
    %v1995 = vld [vmem:[#allocation2 + $0xd0] sm:$0xff]
    %v1996 = vld [vmem:[#allocation2 + $0xd8] sm:$0xff]
    %v1997 = vld [vmem:[#allocation2 + $0xe0] sm:$0xff]
    %v1998 = vld [vmem:[#allocation2 + $0xe8] sm:$0xff]
    %v1999 = vld [vmem:[#allocation2 + $0xf0] sm:$0xff]
    %v2000 = vld [vmem:[#allocation2 + $0xf8] sm:$0xff]
    %v2001 = vld [vmem:[#allocation2 + $0x100] sm:$0xff]
    %v2002 = vld [vmem:[#allocation2 + $0x108] sm:$0xff]
    %v2003 = vld [vmem:[#allocation2 + $0x110] sm:$0xff]
    %v2004 = vld [vmem:[#allocation2 + $0x118] sm:$0xff]
    %v2005 = vld [vmem:[#allocation2 + $0x120] sm:$0xff]
    %v2006 = vld [vmem:[#allocation2 + $0x128] sm:$0xff]
    %v2007 = vld [vmem:[#allocation2 + $0x130] sm:$0xff]
    %v2008 = vld [vmem:[#allocation2 + $0x138] sm:$0xff]
    %v2009 = vld [vmem:[#allocation2 + $0x140] sm:$0xff]
    %v2010 = vld [vmem:[#allocation2 + $0x148] sm:$0xff]
    %v2011 = vld [vmem:[#allocation2 + $0x150] sm:$0xff]
    %v2012 = vld [vmem:[#allocation2 + $0x158] sm:$0xff]
    %v2013 = vld [vmem:[#allocation2 + $0x160] sm:$0xff]
    %v2014 = vld [vmem:[#allocation2 + $0x168] sm:$0xff]
    %v2015 = vld [vmem:[#allocation2 + $0x170] sm:$0xff]
    %v2016 = vld [vmem:[#allocation2 + $0x178] sm:$0xff]
    %v2017 = vld [vmem:[#allocation2 + $0x180] sm:$0xff]
    %v2018 = vld [vmem:[#allocation2 + $0x188] sm:$0xff]
    %v2019 = vld [vmem:[#allocation2 + $0x190] sm:$0xff]
    %v2020 = vld [vmem:[#allocation2 + $0x198] sm:$0xff]
    %v2021 = vld [vmem:[#allocation2 + $0x1a0] sm:$0xff]
    %v2022 = vld [vmem:[#allocation2 + $0x1a8] sm:$0xff]
    %v2023 = vld [vmem:[#allocation2 + $0x1b0] sm:$0xff]
    %v2024 = vld [vmem:[#allocation2 + $0x1b8] sm:$0xff]
    %v2025 = vlaneseq
    %v2026 = vshrl.u32 %v2025, 7
    %v2027 = vsub.s32 4, %v2026
    %v2028 = vrot.slane %v48, %v2027
    %v2030 = vsel %vm1958, %v1968, 0
    %2032 = vmatprep.subr.mxu0 0.0
    %2033 = vmatpush1.msra.mxu0 %v1969
    %2034 = vmatprep.subr.mxu0 0.0
    %2035 = vmatpush1.msra.mxu0 %v1970
    %2036 = vmatprep.subr.mxu0 0.0
    %2037 = vmatpush1.msra.mxu0 %v1971
    %2038 = vmatprep.subr.mxu0 0.0
    %2039 = vmatpush1.msra.mxu0 %v1972
    %2040 = vmatprep.subr.mxu0 0.0
    %2041 = vmatpush1.msra.mxu0 %v1973
    %2042 = vmatprep.subr.mxu0 0.0
    %2043 = vmatpush1.msra.mxu0 %v1974
    %2044 = vmatprep.subr.mxu0 0.0
    %2045 = vmatpush1.msra.mxu0 %v1975
    %2046 = vmatprep.subr.mxu0 0.0
    %2047 = vmatpush1.msra.mxu0 %v1976
    %2048 = vmatprep.subr.mxu0 0.0
    %2049 = vmatpush1.msra.mxu0 %v1977
    %2050 = vmatprep.subr.mxu0 0.0
    %2051 = vmatpush1.msra.mxu0 %v1978
    %2052 = vmatprep.subr.mxu0 0.0
    %2053 = vmatpush1.msra.mxu0 %v1979
    %2054 = vmatprep.subr.mxu0 0.0
    %2055 = vmatpush1.msra.mxu0 %v1980
    %2056 = vmatprep.subr.mxu0 0.0
    %2057 = vmatpush1.msra.mxu0 %v1981
    %2058 = vmatprep.subr.mxu0 0.0
    %2059 = vmatpush1.msra.mxu0 %v1982
    %2060 = vmatprep.subr.mxu0 0.0
    %2061 = vmatpush1.msra.mxu0 %v1983
    %2062 = vmatprep.subr.mxu0 0.0
    %2063 = vmatpush1.msra.mxu0 %v1984
    %2064 = vmatprep.subr.mxu0 0.0
    %2065 = vmatpush1.msra.mxu0 %v1985
    %2066 = vmatprep.subr.mxu0 0.0
    %2067 = vmatpush1.msra.mxu0 %v1986
    %2068 = vmatprep.subr.mxu0 0.0
    %2069 = vmatpush1.msra.mxu0 %v1987
    %2070 = vmatprep.subr.mxu0 0.0
    %2071 = vmatpush1.msra.mxu0 %v1988
    %2072 = vmatprep.subr.mxu0 0.0
    %2073 = vmatpush1.msra.mxu0 %v1989
    %2074 = vmatprep.subr.mxu0 0.0
    %2075 = vmatpush1.msra.mxu0 %v1990
    %2076 = vmatprep.subr.mxu0 0.0
    %2077 = vmatpush1.msra.mxu0 %v1991
    %2078 = vmatprep.subr.mxu0 0.0
    %2079 = vmatpush1.msra.mxu0 %v1992
    %2080 = vmatprep.subr.mxu0 0.0
    %2081 = vmatpush1.msra.mxu0 %v1993
    %2082 = vmatprep.subr.mxu0 0.0
    %2083 = vmatpush1.msra.mxu0 %v1994
    %2084 = vmatprep.subr.mxu0 0.0
    %2085 = vmatpush1.msra.mxu0 %v1995
    %2086 = vmatprep.subr.mxu0 0.0
    %2087 = vmatpush1.msra.mxu0 %v1996
    %2088 = vmatprep.subr.mxu0 0.0
    %2089 = vmatpush1.msra.mxu0 %v1997
    %2090 = vmatprep.subr.mxu0 0.0
    %2091 = vmatpush1.msra.mxu0 %v1998
    %2092 = vmatprep.subr.mxu0 0.0
    %2093 = vmatpush1.msra.mxu0 %v1999
    %2094 = vmatprep.subr.mxu0 0.0
    %2095 = vmatpush1.msra.mxu0 %v2000
    %2096 = vmatprep.mubr.f32.mxu0 %v1964
    %2097 = vmatmul.mubr.f32.gmra.mrb[0].mxu0 %v1961
    %v2098 = vpop.f32.mrb[0].mxu0
    %v2099 = vadd.f32 %v2028, %v2098
    %v2100 = vpop.f32.mrb[0].mxu0
    %2101 = vdwg.mxu0
    %2102 = vmatprep.subr.mxu0 0.0
    %2103 = vmatpush1.msra.mxu0 %v2001
    %2104 = vmatprep.subr.mxu0 0.0
    %2105 = vmatpush1.msra.mxu0 %v2002
    %2106 = vmatprep.subr.mxu0 0.0
    %2107 = vmatpush1.msra.mxu0 %v2003
    %2108 = vmatprep.subr.mxu0 0.0
    %2109 = vmatpush1.msra.mxu0 %v2004
    %2110 = vmatprep.subr.mxu0 0.0
    %2111 = vmatpush1.msra.mxu0 %v2005
    %2112 = vmatprep.subr.mxu0 0.0
    %2113 = vmatpush1.msra.mxu0 %v2006
    %2114 = vmatprep.subr.mxu0 0.0
    %2115 = vmatpush1.msra.mxu0 %v2007
    %2116 = vmatprep.subr.mxu0 0.0
    %2117 = vmatpush1.msra.mxu0 %v2008
    %2118 = vmatprep.subr.mxu0 0.0
    %2119 = vmatpush1.msra.mxu0 %v2009
    %2120 = vmatprep.subr.mxu0 0.0
    %2121 = vmatpush1.msra.mxu0 %v2010
    %2122 = vmatprep.subr.mxu0 0.0
    %2123 = vmatpush1.msra.mxu0 %v2011
    %2124 = vmatprep.subr.mxu0 0.0
    %2125 = vmatpush1.msra.mxu0 %v2012
    %2126 = vmatprep.subr.mxu0 0.0
    %2127 = vmatpush1.msra.mxu0 %v2013
    %2128 = vmatprep.subr.mxu0 0.0
    %2129 = vmatpush1.msra.mxu0 %v2014
    %2130 = vmatprep.subr.mxu0 0.0
    %2131 = vmatpush1.msra.mxu0 %v2015
    %2132 = vmatprep.subr.mxu0 0.0
    %2133 = vmatpush1.msra.mxu0 %v2016
    %2134 = vmatprep.subr.mxu0 0.0
    %2135 = vmatpush1.msra.mxu0 %v2017
    %2136 = vmatprep.subr.mxu0 0.0
    %2137 = vmatpush1.msra.mxu0 %v2018
    %2138 = vmatprep.subr.mxu0 0.0
    %2139 = vmatpush1.msra.mxu0 %v2019
    %2140 = vmatprep.subr.mxu0 0.0
    %2141 = vmatpush1.msra.mxu0 %v2020
    %2142 = vmatprep.subr.mxu0 0.0
    %2143 = vmatpush1.msra.mxu0 %v2021
    %2144 = vmatprep.subr.mxu0 0.0
    %2145 = vmatpush1.msra.mxu0 %v2022
    %2146 = vmatprep.subr.mxu0 0.0
    %2147 = vmatpush1.msra.mxu0 %v2023
    %2148 = vmatprep.subr.mxu0 0.0
    %2149 = vmatpush1.msra.mxu0 %v2024
    %2150 = vmatprep.subr.mxu0 0.0
    %2151 = vmatpush1.msra.mxu0 0.0
    %2152 = vmatprep.subr.mxu0 0.0
    %2153 = vmatpush1.msra.mxu0 0.0
    %2154 = vmatprep.subr.mxu0 0.0
    %2155 = vmatpush1.msra.mxu0 0.0
    %2156 = vmatprep.subr.mxu0 0.0
    %2157 = vmatpush1.msra.mxu0 0.0
    %2158 = vmatprep.subr.mxu0 0.0
    %2159 = vmatpush1.msra.mxu0 0.0
    %2160 = vmatprep.subr.mxu0 0.0
    %2161 = vmatpush1.msra.mxu0 0.0
    %2162 = vmatprep.subr.mxu0 0.0
    %2163 = vmatpush1.msra.mxu0 0.0
    %2164 = vmatprep.subr.mxu0 0.0
    %2165 = vmatpush1.msra.mxu0 0.0
    %2166 = vmatprep.mubr.f32.mxu0 %v2030
    %2167 = vmatmul.mubr.f32.gmra.mrb[0].mxu0 %v1967
    %v2168 = vpop.f32.mrb[0].mxu0
    %v2169 = vadd.f32 %v2099, %v2168
    %v2170 = vpop.f32.mrb[0].mxu0
    %2171 = vdwg.mxu0
    %v2172 = vmul.f32 %v2169, 0.5
    %v2173 = vmul.f32 %v2169, 0.70710677
    %v2174 = verf.f32.pop %v2173
    %v2175 = vadd.f32 %v2174, 1.0
    %v2176 = vmul.f32 %v2172, %v2175
    %v2177 = vld [vmem:[%s5] sm:$0xff]
    %v2178 = vld [vmem:[%s5 + $0x8] sm:$0xff]
    %v2179 = vld [vmem:[%s5 + $0x10] sm:$0xff]
    %v2180 = vld [vmem:[%s5 + $0x18] sm:$0xff]
    %v2181 = vld [vmem:[%s5 + $0x20] sm:$0xff]
    %v2182 = vld [vmem:[%s5 + $0x28] sm:$0xff]
    %v2183 = vld [vmem:[%s5 + $0x30] sm:$0xff]
    %v2184 = vld [vmem:[%s5 + $0x38] sm:$0xff]
    %v2185 = vld [vmem:[%s5 + $0x40] sm:$0xff]
    %v2186 = vld [vmem:[%s5 + $0x48] sm:$0xff]
    %v2187 = vld [vmem:[%s5 + $0x50] sm:$0xff]
    %v2188 = vld [vmem:[%s5 + $0x58] sm:$0xff]
    %v2189 = vld [vmem:[%s5 + $0x60] sm:$0xff]
    %v2190 = vld [vmem:[%s5 + $0x68] sm:$0xff]
    %v2191 = vld [vmem:[%s5 + $0x70] sm:$0xff]
    %v2192 = vld [vmem:[%s5 + $0x78] sm:$0xff]
    %v2193 = vlaneseq
    %v2194 = vshrl.u32 %v2193, 7
    %v2195 = vsub.s32 5, %v2194
    %v2196 = vrot.slane %v48, %v2195
    %2197 = vmatprep.subr.mxu0 0.0
    %2198 = vmatpush1.msra.mxu0 %v2177
    %2199 = vmatprep.subr.mxu0 0.0
    %2200 = vmatpush1.msra.mxu0 %v2178
    %2201 = vmatprep.subr.mxu0 0.0
    %2202 = vmatpush1.msra.mxu0 %v2179
    %2203 = vmatprep.subr.mxu0 0.0
    %2204 = vmatpush1.msra.mxu0 %v2180
    %2205 = vmatprep.subr.mxu0 0.0
    %2206 = vmatpush1.msra.mxu0 %v2181
    %2207 = vmatprep.subr.mxu0 0.0
    %2208 = vmatpush1.msra.mxu0 %v2182
    %2209 = vmatprep.subr.mxu0 0.0
    %2210 = vmatpush1.msra.mxu0 %v2183
    %2211 = vmatprep.subr.mxu0 0.0
    %2212 = vmatpush1.msra.mxu0 %v2184
    %2213 = vmatprep.subr.mxu0 0.0
    %2214 = vmatpush1.msra.mxu0 %v2185
    %2215 = vmatprep.subr.mxu0 0.0
    %2216 = vmatpush1.msra.mxu0 %v2186
    %2217 = vmatprep.subr.mxu0 0.0
    %2218 = vmatpush1.msra.mxu0 %v2187
    %2219 = vmatprep.subr.mxu0 0.0
    %2220 = vmatpush1.msra.mxu0 %v2188
    %2221 = vmatprep.subr.mxu0 0.0
    %2222 = vmatpush1.msra.mxu0 %v2189
    %2223 = vmatprep.subr.mxu0 0.0
    %2224 = vmatpush1.msra.mxu0 %v2190
    %2225 = vmatprep.subr.mxu0 0.0
    %2226 = vmatpush1.msra.mxu0 %v2191
    %2227 = vmatprep.subr.mxu0 0.0
    %2228 = vmatpush1.msra.mxu0 %v2192
    %2229 = vmatprep.subr.mxu0 0.0
    %2230 = vmatpush1.msra.mxu0 0.0
    %2231 = vmatprep.subr.mxu0 0.0
    %2232 = vmatpush1.msra.mxu0 0.0
    %2233 = vmatprep.subr.mxu0 0.0
    %2234 = vmatpush1.msra.mxu0 0.0
    %2235 = vmatprep.subr.mxu0 0.0
    %2236 = vmatpush1.msra.mxu0 0.0
    %2237 = vmatprep.subr.mxu0 0.0
    %2238 = vmatpush1.msra.mxu0 0.0
    %2239 = vmatprep.subr.mxu0 0.0
    %2240 = vmatpush1.msra.mxu0 0.0
    %2241 = vmatprep.subr.mxu0 0.0
    %2242 = vmatpush1.msra.mxu0 0.0
    %2243 = vmatprep.subr.mxu0 0.0
    %2244 = vmatpush1.msra.mxu0 0.0
    %2245 = vmatprep.subr.mxu0 0.0
    %2246 = vmatpush1.msra.mxu0 0.0
    %2247 = vmatprep.subr.mxu0 0.0
    %2248 = vmatpush1.msra.mxu0 0.0
    %2249 = vmatprep.subr.mxu0 0.0
    %2250 = vmatpush1.msra.mxu0 0.0
    %2251 = vmatprep.subr.mxu0 0.0
    %2252 = vmatpush1.msra.mxu0 0.0
    %2253 = vmatprep.subr.mxu0 0.0
    %2254 = vmatpush1.msra.mxu0 0.0
    %2255 = vmatprep.subr.mxu0 0.0
    %2256 = vmatpush1.msra.mxu0 0.0
    %2257 = vmatprep.subr.mxu0 0.0
    %2258 = vmatpush1.msra.mxu0 0.0
    %2259 = vmatprep.subr.mxu0 0.0
    %2260 = vmatpush1.msra.mxu0 0.0
    %2261 = vmatprep.mubr.f32.mxu0 0.0
    %2262 = vmatmul.mubr.f32.gmra.mrb[0].mxu0 %v2176
    %v2263 = vpop.f32.mrb[0].mxu0
    %v2264 = vadd.f32 %v2196, %v2263
    %v2265 = vpop.f32.mrb[0].mxu0
    %2266 = vdwg.mxu0
    %v2267 = vmul.f32 %v2264, 0.5
    %v2268 = vmul.f32 %v2264, 0.70710677
    %v2269 = verf.f32.pop %v2268
    %v2270 = vadd.f32 %v2269, 1.0
    %v2271 = vmul.f32 %v2267, %v2270
    %v2272 = vld [vmem:[%s6] sm:$0xff]
    %v2273 = vld [vmem:[%s6 + $0x8] sm:$0xff]
    %v2274 = vld [vmem:[%s6 + $0x10] sm:$0xff]
    %v2275 = vld [vmem:[%s6 + $0x18] sm:$0xff]
    %v2276 = vlaneseq
    %v2277 = vshrl.u32 %v2276, 7
    %v2278 = vsub.s32 6, %v2277
    %v2279 = vrot.slane %v48, %v2278
    %v2281 = vsel %vm66, %v2271, 0
    %2283 = vmatprep.subr.mxu0 0.0
    %2284 = vmatpush1.msra.mxu0 %v2272
    %2285 = vmatprep.subr.mxu0 0.0
    %2286 = vmatpush1.msra.mxu0 %v2273
    %2287 = vmatprep.subr.mxu0 0.0
    %2288 = vmatpush1.msra.mxu0 %v2274
    %2289 = vmatprep.subr.mxu0 0.0
    %2290 = vmatpush1.msra.mxu0 %v2275
    %2291 = vmatprep.subr.mxu0 0.0
    %2292 = vmatpush1.msra.mxu0 0.0
    %2293 = vmatprep.subr.mxu0 0.0
    %2294 = vmatpush1.msra.mxu0 0.0
    %2295 = vmatprep.subr.mxu0 0.0
    %2296 = vmatpush1.msra.mxu0 0.0
    %2297 = vmatprep.subr.mxu0 0.0
    %2298 = vmatpush1.msra.mxu0 0.0
    %2299 = vmatprep.subr.mxu0 0.0
    %2300 = vmatpush1.msra.mxu0 0.0
    %2301 = vmatprep.subr.mxu0 0.0
    %2302 = vmatpush1.msra.mxu0 0.0
    %2303 = vmatprep.subr.mxu0 0.0
    %2304 = vmatpush1.msra.mxu0 0.0
    %2305 = vmatprep.subr.mxu0 0.0
    %2306 = vmatpush1.msra.mxu0 0.0
    %2307 = vmatprep.subr.mxu0 0.0
    %2308 = vmatpush1.msra.mxu0 0.0
    %2309 = vmatprep.subr.mxu0 0.0
    %2310 = vmatpush1.msra.mxu0 0.0
    %2311 = vmatprep.subr.mxu0 0.0
    %2312 = vmatpush1.msra.mxu0 0.0
    %2313 = vmatprep.subr.mxu0 0.0
    %2314 = vmatpush1.msra.mxu0 0.0
    %2315 = vmatprep.subr.mxu0 0.0
    %2316 = vmatpush1.msra.mxu0 0.0
    %2317 = vmatprep.subr.mxu0 0.0
    %2318 = vmatpush1.msra.mxu0 0.0
    %2319 = vmatprep.subr.mxu0 0.0
    %2320 = vmatpush1.msra.mxu0 0.0
    %2321 = vmatprep.subr.mxu0 0.0
    %2322 = vmatpush1.msra.mxu0 0.0
    %2323 = vmatprep.subr.mxu0 0.0
    %2324 = vmatpush1.msra.mxu0 0.0
    %2325 = vmatprep.subr.mxu0 0.0
    %2326 = vmatpush1.msra.mxu0 0.0
    %2327 = vmatprep.subr.mxu0 0.0
    %2328 = vmatpush1.msra.mxu0 0.0
    %2329 = vmatprep.subr.mxu0 0.0
    %2330 = vmatpush1.msra.mxu0 0.0
    %2331 = vmatprep.subr.mxu0 0.0
    %2332 = vmatpush1.msra.mxu0 0.0
    %2333 = vmatprep.subr.mxu0 0.0
    %2334 = vmatpush1.msra.mxu0 0.0
    %2335 = vmatprep.subr.mxu0 0.0
    %2336 = vmatpush1.msra.mxu0 0.0
    %2337 = vmatprep.subr.mxu0 0.0
    %2338 = vmatpush1.msra.mxu0 0.0
    %2339 = vmatprep.subr.mxu0 0.0
    %2340 = vmatpush1.msra.mxu0 0.0
    %2341 = vmatprep.subr.mxu0 0.0
    %2342 = vmatpush1.msra.mxu0 0.0
    %2343 = vmatprep.subr.mxu0 0.0
    %2344 = vmatpush1.msra.mxu0 0.0
    %2345 = vmatprep.subr.mxu0 0.0
    %2346 = vmatpush1.msra.mxu0 0.0
    %2347 = vmatprep.mubr.f32.mxu0 0.0
    %2348 = vmatmul.mubr.f32.gmra.mrb[0].mxu0 %v2281
    %v2349 = vpop.f32.mrb[0].mxu0
    %v2350 = vadd.f32 %v2279, %v2349
    %v2351 = vpop.f32.mrb[0].mxu0
    %2352 = vdwg.mxu0
    %2353 = vst [vmem:[#allocation5] sm:$0x3] %v2350
    %v2354 = vxor.u32 %v2350, 2147483648
    %v2355 = vmul.f32 %v2354, 1.442695
    %v2356 = vpow.pop %v2355
    %v2357 = vadd.f32 %v2356, 1.0
    %v2358 = vrcp.pop %v2357
    %v2359 = vmul.f32 1.0, %v2358
    %2360 = vst [vmem:[#allocation6] sm:$0x3] %v2359
    // Predicated region
    $region34: #{combined_nn_forward.1} parent=1 // pred_check
      _
    $region35: #{combined_nn_forward.1} parent=1 // pred_check_branch
      %2362 = sbr.rel (0) target = $region37
    $region36: #{combined_nn_forward.1} parent=1 // pred_region
      %s2364 = ssub.s32 32, 32
      %2365 = vsyncadd [#allocation4], %s2364
      %s2367 = sshll.u32 [#allocation5], 4
      %s2368 = int_to_ptr.vmem [resolvable:$true] %s2367
      %2370 = dma.vmem_to_hbm [thread:$0]  %s2368, 32, %s7, [#allocation4]
    $region37: #{combined_nn_forward.1} parent=1 // pred_fallthru
      _
    // Predicated region
    $region38: #{combined_nn_forward.1} parent=1 // pred_check
      _
    $region39: #{combined_nn_forward.1} parent=1 // pred_check_branch
      %2372 = sbr.rel (0) target = $region41
    $region40: #{combined_nn_forward.1} parent=1 // pred_region
      %s2374 = ssub.s32 32, 32
      %2375 = vsyncadd [#allocation7], %s2374
      %s2377 = sshll.u32 [#allocation6], 4
      %s2378 = int_to_ptr.vmem [resolvable:$true] %s2377
      %2380 = dma.vmem_to_hbm [thread:$0]  %s2378, 32, %s8, [#allocation7]
    $region41: #{combined_nn_forward.1} parent=1 // pred_fallthru
      _
    // Predicated region
    $region42: #{combined_nn_forward.1} parent=1 // pred_check
      _
    $region43: #{combined_nn_forward.1} parent=1 // pred_check_branch
      %2382 = sbr.rel (0) target = $region45
    $region44: #{combined_nn_forward.1} parent=1 // pred_region
      %2383 = dma.done [#allocation4], 32
    $region45: #{combined_nn_forward.1} parent=1 // pred_fallthru
      _
    // Predicated region
    $region46: #{combined_nn_forward.1} parent=1 // pred_check
      _
    $region47: #{combined_nn_forward.1} parent=1 // pred_check_branch
      %2385 = sbr.rel (0) target = $region49
    $region48: #{combined_nn_forward.1} parent=1 // pred_region
      %2386 = dma.done [#allocation7], 32
    $region49: #{combined_nn_forward.1} parent=1 // pred_fallthru
      _
    %2387 = vsyncpa [#allocation3], 1
    %2388 = vsyncpa [#allocation4], 1
    %2389 = vsyncpa [#allocation7], 1

</llo_original>
